<compile_context>
chip_gen: v5e
topology: v5e:2x2
jax: 0.10.0
libtpu: 0.0.40
codegen_flags: <defaults>
</compile_context>

<pallas_src>
import jax
import jax.numpy as jnp
from jax import lax
from jax.experimental import pallas as pl
from jax.experimental.pallas import tpu as pltpu

CRP = 128   # padded q/k channel count (>= C//ratio); MXU-depth / tile aligned


def spat_attn_kernel(x_ref,                  # VMEM (1, C, HW)    bf16
                     w_ref,                  # VMEM (2*CRP+C, C)  bf16  (Wq|Wk|gamma*Wv, zero-padded)
                     b_ref,                  # VMEM (2*CRP+C, 1)  f32
                     scale_ref, shift_ref,   # VMEM (C, 1)        f32   (folded BatchNorm)
                     out_ref):               # VMEM (1, C, HW)    f32
    C = out_ref.shape[1]
    crp = (w_ref.shape[0] - C) // 2

    x = x_ref[0]                             # (C, HW) bf16, channel-first

    # Fused Q|K|V projection: a single MXU matmul, f32 accumulation, f32 bias.
    qkv = jnp.dot(w_ref[...], x, preferred_element_type=jnp.float32) + b_ref[...]
    q = qkv[0:crp, :]                        # (CRP, HW)  (rows >= Cr are exactly 0)
    k = qkv[crp:2 * crp, :]                  # (CRP, HW)
    v = qkv[2 * crp:, :]                     # (C, HW), gamma already folded in

    # energy[i, j] = sum_c q[c, i] * k[c, j]  -> (HW, HW)
    # One tile-aligned transpose of q; k stays channel-first (no k.T copy).
    q_pix = jnp.transpose(q, (1, 0)).astype(jnp.bfloat16)          # (HW, CRP)
    energy = jnp.dot(q_pix, k.astype(jnp.bfloat16),
                     preferred_element_type=jnp.float32)           # (HW, HW) f32

    # Softmax over the last axis, stats in f32; normalize via EUP reciprocal +
    # multiply instead of an (HW, HW) divide.
    m = jnp.max(energy, axis=-1, keepdims=True)
    p = jnp.exp(energy - m)
    l = jnp.sum(p, axis=-1, keepdims=True)
    attn = (p * pl.reciprocal(l, approx=True)).astype(jnp.bfloat16)

    # out[c, i] = sum_j v[c, j] * attn[i, j]  ==  V @ attn^T (transposed-RHS MXU form)
    out = lax.dot_general(v.astype(jnp.bfloat16), attn,
                          dimension_numbers=(((1,), (1,)), ((), ())),
                          preferred_element_type=jnp.float32)      # (C, HW) f32

    # ReLU then inference-form BatchNorm; lane-dense (HW-minor) store.
    out = jnp.maximum(out, 0.0)
    out_ref[0] = out * scale_ref[...] + shift_ref[...]


def spat_attn(x_nchw, params):
    """x_nchw: (B, C, H, W) float32. Returns (B, C, H, W) float32."""
    B, C, H, W = x_nchw.shape
    HW = H * W
    Cr = params["wq"].shape[0]
    assert Cr <= CRP, "q/k channel count exceeds padded MXU depth"
    f32 = jnp.float32

    # Zero-pad q/k output channels to CRP (exact: padded channels contribute 0 to energy).
    wq_p = jnp.zeros((CRP, C), f32).at[:Cr].set(params["wq"])
    wk_p = jnp.zeros((CRP, C), f32).at[:Cr].set(params["wk"])
    bq_p = jnp.zeros((CRP,), f32).at[:Cr].set(params["bq"])
    bk_p = jnp.zeros((CRP,), f32).at[:Cr].set(params["bk"])

    # gamma multiplies the attention output BEFORE the ReLU, so it commutes with
    # the (linear) attention matmul -> fold into the value projection.
    gamma = params["gamma"].astype(f32)                                        # (1,)
    w_fused = jnp.concatenate([wq_p, wk_p, gamma[:, None] * params["wv"]], 0)  # (2*CRP+C, C)
    b_fused = jnp.concatenate([bq_p, bk_p, gamma * params["bv"]], 0).reshape(-1, 1)

    # Fold BatchNorm (eval form) into per-channel scale/shift.
    inv_std = lax.rsqrt(params["bn_var"] + 1e-5)
    scale = (params["bn_weight"] * inv_std).reshape(C, 1)
    shift = (params["bn_bias"] - params["bn_mean"] * params["bn_weight"] * inv_std).reshape(C, 1)

    # Channel-first (B, C, HW): a free reshape from NCHW (no transpose round trips).
    x_cf = x_nchw.reshape(B, C, HW).astype(jnp.bfloat16)
    w_fused = w_fused.astype(jnp.bfloat16)

    full = lambda shape: pl.BlockSpec(shape, lambda b: (0,) * len(shape))

    out_cf = pl.pallas_call(
        spat_attn_kernel,
        out_shape=jax.ShapeDtypeStruct((B, C, HW), jnp.float32),
        grid_spec=pltpu.PrefetchScalarGridSpec(
            num_scalar_prefetch=0,
            grid=(B,),
            in_specs=[
                pl.BlockSpec((1, C, HW), lambda b: (b, 0, 0)),   # x (bf16)
                full((2 * CRP + C, C)),                          # fused weights (bf16)
                full((2 * CRP + C, 1)),                          # fused bias (f32)
                full((C, 1)),                                    # BN scale
                full((C, 1)),                                    # BN shift
            ],
            out_specs=pl.BlockSpec((1, C, HW), lambda b: (b, 0, 0)),
        ),
        # Batch axis parallel -> shards across v7x's 2 TensorCores; neutral on v5e/v6e.
        compiler_params=pltpu.CompilerParams(dimension_semantics=("parallel",)),
    )(x_cf, w_fused, b_fused, scale, shift)

    return out_cf.reshape(B, C, H, W)


def init_params(key, C, ratio=8):
    Cr = C // ratio
    ks = jax.random.split(key, 10)
    return {
        # Conv2d(kernel_size=1) weights stored conv-style as (C_out, C_in).
        "wq": 0.1 * jax.random.normal(ks[0], (Cr, C), jnp.float32),
        "bq": 0.1 * jax.random.normal(ks[1], (Cr,), jnp.float32),
        "wk": 0.1 * jax.random.normal(ks[2], (Cr, C), jnp.float32),
        "bk": 0.1 * jax.random.normal(ks[3], (Cr,), jnp.float32),
        "wv": 0.1 * jax.random.normal(ks[4], (C, C), jnp.float32),
        "bv": 0.1 * jax.random.normal(ks[5], (C,), jnp.float32),
        # Module inits gamma to 0; use a nonzero value so the attention path is exercised.
        "gamma": jnp.array([0.5], jnp.float32),
        "bn_weight": 1.0 + 0.1 * jax.random.normal(ks[6], (C,), jnp.float32),
        "bn_bias": 0.1 * jax.random.normal(ks[7], (C,), jnp.float32),
        "bn_mean": 0.1 * jax.random.normal(ks[8], (C,), jnp.float32),
        "bn_var": jax.random.uniform(ks[9], (C,), jnp.float32, 0.5, 1.5),
    }


def reference(x_nchw, params):
    """Pure-JAX f32 reference mirroring the PyTorch module semantics."""
    B, C, H, W = x_nchw.shape
    HW = H * W
    x_cf = x_nchw.reshape(B, C, HW)
    q = jnp.einsum("oc,bcp->bop", params["wq"], x_cf) + params["bq"][None, :, None]
    k = jnp.einsum("oc,bcp->bop", params["wk"], x_cf) + params["bk"][None, :, None]
    v = jnp.einsum("oc,bcp->bop", params["wv"], x_cf) + params["bv"][None, :, None]
    energy = jnp.einsum("bci,bcj->bij", q, k)          # (B, HW, HW)
    attn = jax.nn.softmax(energy, axis=-1)
    out = jnp.einsum("bcj,bij->bci", v, attn)          # (B, C, HW)
    out = params["gamma"][0] * out
    out = jnp.maximum(out, 0.0)                        # bn = Sequential(ReLU, BatchNorm2d)
    inv_std = 1.0 / jnp.sqrt(params["bn_var"] + 1e-5)
    out = ((out - params["bn_mean"][None, :, None])
           * (params["bn_weight"] * inv_std)[None, :, None]
           + params["bn_bias"][None, :, None])
    return out.reshape(B, C, H, W)


if __name__ == "__main__":
    B, C, H, W = 2, 32, 16, 16          # in_dim=32, ratio=8 -> C//ratio=4
    key = jax.random.PRNGKey(0)
    kx, kp = jax.random.split(key)
    x = jax.random.normal(kx, (B, C, H, W), jnp.float32)
    params = init_params(kp, C, ratio=8)

    y = jax.block_until_ready(spat_attn(x, params))
    y_ref = reference(x, params)

    assert y.shape == (B, C, H, W)
    # bf16 MXU inputs + approximate-reciprocal softmax -> relaxed tolerance vs f32 reference.
    max_err = float(jnp.max(jnp.abs(y - y_ref)))
    assert jnp.allclose(y, y_ref, atol=2e-2, rtol=2e-2), \
        f"mismatch vs reference (max abs err {max_err:.3e})"
    print("KERNEL_OK")
</pallas_src>

<mosaic_0001>
module attributes {stable_mosaic.version = 11 : i64} {
  func.func @spat_attn_kernel(%arg0: i32, %arg1: memref<1x32x256xbf16, #tpu.memory_space<vmem>>, %arg2: memref<288x32xbf16, #tpu.memory_space<vmem>>, %arg3: memref<288x1xf32, #tpu.memory_space<vmem>>, %arg4: memref<32x1xf32, #tpu.memory_space<vmem>>, %arg5: memref<32x1xf32, #tpu.memory_space<vmem>>, %arg6: memref<1x32x256xf32, #tpu.memory_space<vmem>>) attributes {dimension_semantics = [#tpu.dimension_semantics<parallel>], iteration_bounds = array<i64: 2>, scalar_prefetch = 0 : i64, scratch_operands = 0 : i64, tpu.core_type = #tpu.core_type<tc>, window_params = [{transform_indices = @transform_0, window_bounds = array<i64: 1, 32, 256>}, {pipeline_mode = #tpu.pipeline_mode<synchronous>, transform_indices = @transform_1, window_bounds = array<i64: 288, 32>}, {pipeline_mode = #tpu.pipeline_mode<synchronous>, transform_indices = @transform_2, window_bounds = array<i64: 288, 1>}, {pipeline_mode = #tpu.pipeline_mode<synchronous>, transform_indices = @transform_3, window_bounds = array<i64: 32, 1>}, {pipeline_mode = #tpu.pipeline_mode<synchronous>, transform_indices = @transform_4, window_bounds = array<i64: 32, 1>}, {transform_indices = @transform_5, window_bounds = array<i64: 1, 32, 256>}]} {
    %c0 = arith.constant 0 : index
    %c0_0 = arith.constant 0 : index
    %c0_1 = arith.constant 0 : index
    %0 = vector.load %arg1[%c0, %c0_0, %c0_1] : memref<1x32x256xbf16, #tpu.memory_space<vmem>>, vector<1x32x256xbf16>
    %1 = vector.shape_cast %0 : vector<1x32x256xbf16> to vector<32x256xbf16>
    %c0_2 = arith.constant 0 : index
    %c0_3 = arith.constant 0 : index
    %2 = vector.load %arg2[%c0_2, %c0_3] : memref<288x32xbf16, #tpu.memory_space<vmem>>, vector<288x32xbf16>
    %cst = arith.constant dense<0.000000e+00> : vector<288x256xf32>
    %3 = tpu.matmul %2, %1, %cst {dimension_numbers = #tpu.dot_dimension_numbers<[1], [0], [0], [1], [0, 0, 1, 1], [], []>} : vector<288x32xbf16>, vector<32x256xbf16>, vector<288x256xf32> -> vector<288x256xf32>
    %c0_4 = arith.constant 0 : index
    %c0_5 = arith.constant 0 : index
    %4 = vector.load %arg3[%c0_4, %c0_5] : memref<288x1xf32, #tpu.memory_space<vmem>>, vector<288x1xf32>
    %5 = vector.broadcast %4 : vector<288x1xf32> to vector<288x256xf32>
    %6 = arith.addf %3, %5 : vector<288x256xf32>
    %7 = vector.extract_strided_slice %6 {offsets = [0, 0], sizes = [128, 256], strides = [1, 1]} : vector<288x256xf32> to vector<128x256xf32>
    %8 = vector.extract_strided_slice %6 {offsets = [128, 0], sizes = [128, 256], strides = [1, 1]} : vector<288x256xf32> to vector<128x256xf32>
    %9 = vector.extract_strided_slice %6 {offsets = [256, 0], sizes = [32, 256], strides = [1, 1]} : vector<288x256xf32> to vector<32x256xf32>
    %10 = tpu.transpose %7, [1, 0] : vector<128x256xf32> -> vector<256x128xf32>
    %11 = arith.truncf %10 : vector<256x128xf32> to vector<256x128xbf16>
    %12 = arith.truncf %8 : vector<128x256xf32> to vector<128x256xbf16>
    %cst_6 = arith.constant dense<0.000000e+00> : vector<256x256xf32>
    %13 = tpu.matmul %11, %12, %cst_6 {dimension_numbers = #tpu.dot_dimension_numbers<[1], [0], [0], [1], [0, 0, 1, 1], [], []>} : vector<256x128xbf16>, vector<128x256xbf16>, vector<256x256xf32> -> vector<256x256xf32>
    %cst_7 = arith.constant dense<0xFF800000> : vector<256xf32>
    %14 = vector.multi_reduction <maximumf>, %13, %cst_7 [1] : vector<256x256xf32> to vector<256xf32>
    %15 = vector.shape_cast %14 : vector<256xf32> to vector<256x1xf32>
    %16 = vector.broadcast %15 : vector<256x1xf32> to vector<256x256xf32>
    %17 = arith.subf %13, %16 : vector<256x256xf32>
    %18 = math.exp %17 : vector<256x256xf32>
    %cst_8 = arith.constant dense<0.000000e+00> : vector<256xf32>
    %19 = vector.multi_reduction <add>, %18, %cst_8 [1] : vector<256x256xf32> to vector<256xf32>
    %20 = vector.shape_cast %19 : vector<256xf32> to vector<256x1xf32>
    %21 = tpu.reciprocal %20 {approx = true} : vector<256x1xf32> -> vector<256x1xf32>
    %22 = vector.broadcast %21 : vector<256x1xf32> to vector<256x256xf32>
    %23 = arith.mulf %18, %22 : vector<256x256xf32>
    %24 = arith.truncf %23 : vector<256x256xf32> to vector<256x256xbf16>
    %25 = arith.truncf %9 : vector<32x256xf32> to vector<32x256xbf16>
    %cst_9 = arith.constant dense<0.000000e+00> : vector<32x256xf32>
    %26 = tpu.matmul %25, %24, %cst_9 {dimension_numbers = #tpu.dot_dimension_numbers<[1], [1], [0], [0], [0, 0, 1, 0], [], []>} : vector<32x256xbf16>, vector<256x256xbf16>, vector<32x256xf32> -> vector<32x256xf32>
    %cst_10 = arith.constant 0.000000e+00 : f32
    %27 = vector.broadcast %cst_10 : f32 to vector<32x256xf32>
    %28 = arith.maximumf %26, %27 : vector<32x256xf32>
    %c0_11 = arith.constant 0 : index
    %c0_12 = arith.constant 0 : index
    %29 = vector.load %arg4[%c0_11, %c0_12] : memref<32x1xf32, #tpu.memory_space<vmem>>, vector<32x1xf32>
    %30 = vector.broadcast %29 : vector<32x1xf32> to vector<32x256xf32>
    %31 = arith.mulf %28, %30 : vector<32x256xf32>
    %c0_13 = arith.constant 0 : index
    %c0_14 = arith.constant 0 : index
    %32 = vector.load %arg5[%c0_13, %c0_14] : memref<32x1xf32, #tpu.memory_space<vmem>>, vector<32x1xf32>
    %33 = vector.broadcast %32 : vector<32x1xf32> to vector<32x256xf32>
    %34 = arith.addf %31, %33 : vector<32x256xf32>
    %c0_15 = arith.constant 0 : index
    %c0_16 = arith.constant 0 : index
    %c0_17 = arith.constant 0 : index
    %35 = vector.load %arg6[%c0_15, %c0_16, %c0_17] : memref<1x32x256xf32, #tpu.memory_space<vmem>>, vector<1x32x256xf32>
    %36 = vector.shape_cast %35 : vector<1x32x256xf32> to vector<32x256xf32>
    %37 = vector.shape_cast %34 : vector<32x256xf32> to vector<1x32x256xf32>
    tpu.vector_store %arg6[%c0_15, %c0_16, %c0_17], %37 {strides = array<i32>} : memref<1x32x256xf32, #tpu.memory_space<vmem>>, vector<1x32x256xf32>,
    return
  }
  func.func @transform_0(%arg0: i32) -> (i32, i32, i32) {
    %c0_i32 = arith.constant 0 : i32
    %c0_i32_0 = arith.constant 0 : i32
    %c0_i32_1 = arith.constant 0 : i32
    return %arg0, %c0_i32, %c0_i32_0 : i32, i32, i32
  }
  func.func @transform_1(%arg0: i32) -> (i32, i32) {
    %c0_i32 = arith.constant 0 : i32
    %c0_i32_0 = arith.constant 0 : i32
    %c0_i32_1 = arith.constant 0 : i32
    return %c0_i32, %c0_i32_0 : i32, i32
  }
  func.func @transform_2(%arg0: i32) -> (i32, i32) {
    %c0_i32 = arith.constant 0 : i32
    %c0_i32_0 = arith.constant 0 : i32
    %c0_i32_1 = arith.constant 0 : i32
    return %c0_i32, %c0_i32_0 : i32, i32
  }
  func.func @transform_3(%arg0: i32) -> (i32, i32) {
    %c0_i32 = arith.constant 0 : i32
    %c0_i32_0 = arith.constant 0 : i32
    %c0_i32_1 = arith.constant 0 : i32
    return %c0_i32, %c0_i32_0 : i32, i32
  }
  func.func @transform_4(%arg0: i32) -> (i32, i32) {
    %c0_i32 = arith.constant 0 : i32
    %c0_i32_0 = arith.constant 0 : i32
    %c0_i32_1 = arith.constant 0 : i32
    return %c0_i32, %c0_i32_0 : i32, i32
  }
  func.func @transform_5(%arg0: i32) -> (i32, i32, i32) {
    %c0_i32 = arith.constant 0 : i32
    %c0_i32_0 = arith.constant 0 : i32
    %c0_i32_1 = arith.constant 0 : i32
    return %arg0, %c0_i32, %c0_i32_0 : i32, i32, i32
  }
}

</mosaic_0001>

<llo_original>
// kernel: tpu_custom_call.1
$region0: #{tpu_custom_call.1}
  #allocation0 [shape = 'u32[]', space=smem, size = 0x4, offset = 0x4, fixed_abs, tag = 'smem constant byte address 0x4 - core index']
  #allocation1 [shape = 'u32[72,128]{1,0:T(1,128)}', space=vmem, size = 0x9000, scoped, tag = 'internal scratch']
  %s0 = inlined_call_operand.vmem [shape: bf16[2,32,256], index: 0, kind: input, shape index: {}]
  %s1 = inlined_call_operand.vmem [shape: bf16[288,32], index: 1, kind: input, shape index: {}]
  %s2 = inlined_call_operand.vmem [shape: f32[288,1], index: 2, kind: input, shape index: {}]
  %s3 = inlined_call_operand.vmem [shape: f32[32,1], index: 3, kind: input, shape index: {}]
  %s4 = inlined_call_operand.vmem [shape: f32[32,1], index: 4, kind: input, shape index: {}]
  %s5 = inlined_call_operand.hbm [shape: f32[2,32,256], index: 5, kind: output, shape index: {}]
  %s6 = sld [smem:[#allocation0]]
  $region53: #{tpu_custom_call.1} parent=0
    _
  %s8 = ssub.s32 1, %s6
  %s9 = scalar_select 0, %s8, %s6
  $region1: #{tpu_custom_call.1} parent=0
    #allocation2 [shape = 'u8[65536]{0}', space=vmem, size = 0x10000, scoped, tag = 'output window, operand 0']
    #allocation3 [shape = 's32[2]{0}', space=sflag, size = 0x8, scoped, tag = 'scoped memory for tpu_custom_call.1']
    %10 = vsyncpa [#allocation3], 0
    %s11 = scalar_lea.sflag [#allocation3], 1
    %12 = vsyncpa %s11, 0
    loop: start=0, step=1, limit=4
    $region2: #{tpu_custom_call.1} parent=1 // loop_pre_header
      _
    $region3: #{tpu_custom_call.1} parent=1 // loop_header
      %s14 = sphi 0, %s18
      %p15 = scmp.ge.s32.totalorder %s14, 4
      %s24 = sphi 0, %s26
      %s27 = sphi 0, %s24
      %s28 = sphi 0, %s27
      %s44 = sphi 0, %s28
      %s48 = sphi 0, %s48
      %s50 = sphi 0, %s48
      %s51 = sphi 0, %s50
      %s65 = sphi 0, %s51
      %s69 = sphi 0, %s69
      %s71 = sphi 0, %s69
      %s72 = sphi 0, %s71
      %s86 = sphi 0, %s72
      %s90 = sphi 0, %s90
      %s92 = sphi 0, %s90
      %s93 = sphi 0, %s92
      %s107 = sphi 0, %s93
      %s111 = sphi 0, %s111
      %s113 = sphi 0, %s111
      %s114 = sphi 0, %s113
      %s128 = sphi 0, %s114
      %s134 = sphi 0, %s136
      %s137 = sphi 0, %s134
      %s138 = sphi 0, %s137
      %s154 = sphi 0, %s138
    $region4: #{tpu_custom_call.1} parent=1 // loop_header_branch
      %17 = sbr.rel (%p15) target = $region8
    $region5: #{tpu_custom_call.1} parent=1 // loop_body
      %s19 = ssub.s32 %s14, 1
      %s20 = ssub.s32 %s14, 2
      %s21 = sadd.s32 %s14, 1
      %s22 = ssub.s32 %s14, %s21
      %p23 = scmp.eq.s32.totalorder %s22, 0
      %s25 = sadd.s32 %s24, 1
      %s26 = scalar_select %p23, %s24, %s25
      %p29 = pneg %p23
      %p30 = scmp.eq.s32.totalorder %s14, 1
      %p31 = por %p29, %p30
      %p32 = scmp.ne.s32.totalorder %s24, %s27
      %p33 = scmp.eq.s32.totalorder %s14, 0
      %p34 = por %p32, %p33
      %p35 = scmp.ne.s32.totalorder %s24, %s27
      %p36 = scmp.eq.s32.totalorder %s19, 1
      %p37 = por %p35, %p36
      %p38 = scmp.ne.s32.totalorder %s27, %s28
      %p39 = scmp.eq.s32.totalorder %s19, 0
      %p40 = por %p38, %p39
      %p41 = scmp.ne.s32.totalorder %s27, %s28
      %p42 = scmp.eq.s32.totalorder %s20, 1
      %p43 = por %p41, %p42
      %p45 = scmp.ne.s32.totalorder %s28, %s44
      %p46 = scmp.eq.s32.totalorder %s20, 0
      %p47 = por %p45, %p46
      %s49 = sadd.s32 %s48, 1
      %p52 = scmp.eq.s32.totalorder %s14, 1
      %p53 = scmp.ne.s32.totalorder %s48, %s50
      %p54 = scmp.eq.s32.totalorder %s14, 0
      %p55 = por %p53, %p54
      %p56 = scmp.ne.s32.totalorder %s48, %s50
      %p57 = scmp.eq.s32.totalorder %s19, 1
      %p58 = por %p56, %p57
      %p59 = scmp.ne.s32.totalorder %s50, %s51
      %p60 = scmp.eq.s32.totalorder %s19, 0
      %p61 = por %p59, %p60
      %p62 = scmp.ne.s32.totalorder %s50, %s51
      %p63 = scmp.eq.s32.totalorder %s20, 1
      %p64 = por %p62, %p63
      %p66 = scmp.ne.s32.totalorder %s51, %s65
      %p67 = scmp.eq.s32.totalorder %s20, 0
      %p68 = por %p66, %p67
      %s70 = sadd.s32 %s69, 1
      %p73 = scmp.eq.s32.totalorder %s14, 1
      %p74 = scmp.ne.s32.totalorder %s69, %s71
      %p75 = scmp.eq.s32.totalorder %s14, 0
      %p76 = por %p74, %p75
      %p77 = scmp.ne.s32.totalorder %s69, %s71
      %p78 = scmp.eq.s32.totalorder %s19, 1
      %p79 = por %p77, %p78
      %p80 = scmp.ne.s32.totalorder %s71, %s72
      %p81 = scmp.eq.s32.totalorder %s19, 0
      %p82 = por %p80, %p81
      %p83 = scmp.ne.s32.totalorder %s71, %s72
      %p84 = scmp.eq.s32.totalorder %s20, 1
      %p85 = por %p83, %p84
      %p87 = scmp.ne.s32.totalorder %s72, %s86
      %p88 = scmp.eq.s32.totalorder %s20, 0
      %p89 = por %p87, %p88
      %s91 = sadd.s32 %s90, 1
      %p94 = scmp.eq.s32.totalorder %s14, 1
      %p95 = scmp.ne.s32.totalorder %s90, %s92
      %p96 = scmp.eq.s32.totalorder %s14, 0
      %p97 = por %p95, %p96
      %p98 = scmp.ne.s32.totalorder %s90, %s92
      %p99 = scmp.eq.s32.totalorder %s19, 1
      %p100 = por %p98, %p99
      %p101 = scmp.ne.s32.totalorder %s92, %s93
      %p102 = scmp.eq.s32.totalorder %s19, 0
      %p103 = por %p101, %p102
      %p104 = scmp.ne.s32.totalorder %s92, %s93
      %p105 = scmp.eq.s32.totalorder %s20, 1
      %p106 = por %p104, %p105
      %p108 = scmp.ne.s32.totalorder %s93, %s107
      %p109 = scmp.eq.s32.totalorder %s20, 0
      %p110 = por %p108, %p109
      %s112 = sadd.s32 %s111, 1
      %p115 = scmp.eq.s32.totalorder %s14, 1
      %p116 = scmp.ne.s32.totalorder %s111, %s113
      %p117 = scmp.eq.s32.totalorder %s14, 0
      %p118 = por %p116, %p117
      %p119 = scmp.ne.s32.totalorder %s111, %s113
      %p120 = scmp.eq.s32.totalorder %s19, 1
      %p121 = por %p119, %p120
      %p122 = scmp.ne.s32.totalorder %s113, %s114
      %p123 = scmp.eq.s32.totalorder %s19, 0
      %p124 = por %p122, %p123
      %p125 = scmp.ne.s32.totalorder %s113, %s114
      %p126 = scmp.eq.s32.totalorder %s20, 1
      %p127 = por %p125, %p126
      %p129 = scmp.ne.s32.totalorder %s114, %s128
      %p130 = scmp.eq.s32.totalorder %s20, 0
      %p131 = por %p129, %p130
      %s132 = ssub.s32 %s14, %s21
      %p133 = scmp.eq.s32.totalorder %s132, 0
      %s135 = sadd.s32 %s134, 1
      %s136 = scalar_select %p133, %s134, %s135
      %p139 = pneg %p133
      %p140 = scmp.eq.s32.totalorder %s14, 1
      %p141 = por %p139, %p140
      %p142 = scmp.ne.s32.totalorder %s134, %s137
      %p143 = scmp.eq.s32.totalorder %s14, 0
      %p144 = por %p142, %p143
      %p145 = scmp.ne.s32.totalorder %s134, %s137
      %p146 = scmp.eq.s32.totalorder %s19, 1
      %p147 = por %p145, %p146
      %p148 = scmp.ne.s32.totalorder %s137, %s138
      %p149 = scmp.eq.s32.totalorder %s19, 0
      %p150 = por %p148, %p149
      %p151 = scmp.ne.s32.totalorder %s137, %s138
      %p152 = scmp.eq.s32.totalorder %s20, 1
      %p153 = por %p151, %p152
      %p155 = scmp.ne.s32.totalorder %s138, %s154
      %p156 = scmp.eq.s32.totalorder %s20, 0
      %p157 = por %p155, %p156
      %p158 = scmp.le.s32.totalorder 1, %s14
      %p159 = scmp.lt.s32.totalorder %s14, 3
      %p160 = pnand %p158, %p159
      %p161 = pneg %p160
      // Predicated region
      $region9: #{tpu_custom_call.1} parent=5 // pred_check
        _
      $region10: #{tpu_custom_call.1} parent=5 // pred_check_branch
        %163 = sbr.rel (%p160) target = $region12
      $region11: #{tpu_custom_call.1} parent=5 // pred_region
        %s164 = ssub.s32 %s14, 1
        // Predicated region
        $region13: #{tpu_custom_call.1} parent=11 // pred_check
          %p165 = pneg %p61
        $region14: #{tpu_custom_call.1} parent=11 // pred_check_branch
          %167 = sbr.rel (%p165) target = $region16
        $region15: #{tpu_custom_call.1} parent=11 // pred_region
          _
        $region16: #{tpu_custom_call.1} parent=11 // pred_fallthru
          _
        // Predicated region
        $region17: #{tpu_custom_call.1} parent=11 // pred_check
          %p168 = pneg %p82
        $region18: #{tpu_custom_call.1} parent=11 // pred_check_branch
          %170 = sbr.rel (%p168) target = $region20
        $region19: #{tpu_custom_call.1} parent=11 // pred_region
          _
        $region20: #{tpu_custom_call.1} parent=11 // pred_fallthru
          _
        // Predicated region
        $region21: #{tpu_custom_call.1} parent=11 // pred_check
          %p171 = pneg %p103
        $region22: #{tpu_custom_call.1} parent=11 // pred_check_branch
          %173 = sbr.rel (%p171) target = $region24
        $region23: #{tpu_custom_call.1} parent=11 // pred_region
          _
        $region24: #{tpu_custom_call.1} parent=11 // pred_fallthru
          _
        // Predicated region
        $region25: #{tpu_custom_call.1} parent=11 // pred_check
          %p174 = pneg %p124
        $region26: #{tpu_custom_call.1} parent=11 // pred_check_branch
          %176 = sbr.rel (%p174) target = $region28
        $region27: #{tpu_custom_call.1} parent=11 // pred_region
          _
        $region28: #{tpu_custom_call.1} parent=11 // pred_fallthru
          _
      $region12: #{tpu_custom_call.1} parent=5 // pred_fallthru
        _
      %p177 = scmp.lt.s32.totalorder %s14, 2
      // Predicated region
      $region29: #{tpu_custom_call.1} parent=5 // pred_check
        %p178 = pneg %p177
      $region30: #{tpu_custom_call.1} parent=5 // pred_check_branch
        %180 = sbr.rel (%p178) target = $region32
      $region31: #{tpu_custom_call.1} parent=5 // pred_region
        // Predicated region
        $region33: #{tpu_custom_call.1} parent=31 // pred_check
          %p181 = pneg %p34
        $region34: #{tpu_custom_call.1} parent=31 // pred_check_branch
          %183 = sbr.rel (%p181) target = $region36
        $region35: #{tpu_custom_call.1} parent=31 // pred_region
          %p184 = scmp.lt.s32.totalorder %s14, 1
          %s185 = scalar_select %p184, %s14, 1
          %s186 = smul.addr %s185, 8
          %s187 = smul.addr %s186, 4
          %s188 = scalar_lea.vmem %s0, %s187
        $region36: #{tpu_custom_call.1} parent=31 // pred_fallthru
          _
      $region32: #{tpu_custom_call.1} parent=5 // pred_fallthru
        _
      %p189 = scmp.le.s32.totalorder 1, %s14
      %p190 = scmp.lt.s32.totalorder %s14, 3
      %p191 = pnand %p189, %p190
      %p192 = pneg %p191
      // Predicated region
      $region37: #{tpu_custom_call.1} parent=5 // pred_check
        _
      $region38: #{tpu_custom_call.1} parent=5 // pred_check_branch
        %194 = sbr.rel (%p191) target = $region40
      $region39: #{tpu_custom_call.1} parent=5 // pred_region
        %s195 = ssub.s32 %s14, 1
        %p196 = scmp.lt.s32.totalorder %s19, 1
        %s197 = scalar_select %p196, %s19, 1
        %s198 = smul.addr %s197, 8
        %s199 = smul.addr %s198, 4
        %s200 = scalar_lea.vmem %s0, %s199
        %p201 = pneg %p40
        %p202 = pneg %p37
        %p203 = pneg %p61
        %p204 = pneg %p58
        %p205 = pneg %p82
        %p206 = pneg %p79
        %p207 = pneg %p103
        %p208 = pneg %p100
        %p209 = pneg %p124
        %p210 = pneg %p121
        %p211 = pneg %p150
        %p212 = pneg %p147
        %s213 = sand.u32 %s137, 1
        %s214 = scalar_lea.sflag [#allocation3], %s213
        %s215 = sand.u32 %s137, 1
        %s216 = smul.addr %s215, 64
        %s217 = scalar_lea.vmem [#allocation2], %s216
        %p218 = scmp.lt.s32.totalorder %s19, 1
        %s219 = scalar_select %p218, %s19, 1
        %s220 = smul.addr %s219, 8
        %s221 = smul.addr %s220, 4
        %s222 = scalar_lea.vmem %s0, %s221
        %v224 = vld [vmem:[%s222] sm:$0xff]
        %v225 = vld [vmem:[%s222 + $0x8] sm:$0xff]
        %v226 = vld [vmem:[%s222 + $0x10] sm:$0xff]
        %v227 = vld [vmem:[%s222 + $0x18] sm:$0xff]
        %v228 = vld [vmem:[%s1] sm:$0xf]
        %v229 = vld [vmem:[%s1 + $0x4] sm:$0xf]
        %v230 = vld [vmem:[%s1 + $0x8] sm:$0xf]
        %v231 = vld [vmem:[%s1 + $0xc] sm:$0xf]
        %v232 = vld [vmem:[%s1 + $0x10] sm:$0xf]
        %v233 = vld [vmem:[%s1 + $0x14] sm:$0xf]
        %v234 = vld [vmem:[%s1 + $0x18] sm:$0xf]
        %v235 = vld [vmem:[%s1 + $0x1c] sm:$0xf]
        %v236 = vld [vmem:[%s1 + $0x20] sm:$0xf]
        %v237 = vld [vmem:[%s1 + $0x24] sm:$0xf]
        %v238 = vld [vmem:[%s1 + $0x28] sm:$0xf]
        %v239 = vld [vmem:[%s1 + $0x2c] sm:$0xf]
        %v240 = vld [vmem:[%s1 + $0x30] sm:$0xf]
        %v241 = vld [vmem:[%s1 + $0x34] sm:$0xf]
        %v242 = vld [vmem:[%s1 + $0x38] sm:$0xf]
        %v243 = vld [vmem:[%s1 + $0x3c] sm:$0xf]
        %v244 = vld [vmem:[%s1 + $0x40] sm:$0xf]
        %v245 = vld [vmem:[%s1 + $0x44] sm:$0xf]
        %v246 = vld [vmem:[%s1 + $0x48] sm:$0xf]
        %v247 = vld [vmem:[%s1 + $0x4c] sm:$0xf]
        %v248 = vld [vmem:[%s1 + $0x50] sm:$0xf]
        %v249 = vld [vmem:[%s1 + $0x54] sm:$0xf]
        %v250 = vld [vmem:[%s1 + $0x58] sm:$0xf]
        %v251 = vld [vmem:[%s1 + $0x5c] sm:$0xf]
        %v252 = vld [vmem:[%s1 + $0x60] sm:$0xf]
        %v253 = vld [vmem:[%s1 + $0x64] sm:$0xf]
        %v254 = vld [vmem:[%s1 + $0x68] sm:$0xf]
        %v255 = vld [vmem:[%s1 + $0x6c] sm:$0xf]
        %v256 = vld [vmem:[%s1 + $0x70] sm:$0xf]
        %v257 = vld [vmem:[%s1 + $0x74] sm:$0xf]
        %v258 = vld [vmem:[%s1 + $0x78] sm:$0xf]
        %v259 = vld [vmem:[%s1 + $0x7c] sm:$0xf]
        %v260 = vld [vmem:[%s1 + $0x80] sm:$0xf]
        %v261 = vld [vmem:[%s1 + $0x84] sm:$0xf]
        %v262 = vld [vmem:[%s1 + $0x88] sm:$0xf]
        %v263 = vld [vmem:[%s1 + $0x8c] sm:$0xf]
        %v264 = vld [vmem:[%s2] sm:$0xff]
        %v265 = vld [vmem:[%s2 + $0x8] sm:$0xff]
        %v266 = vld [vmem:[%s2 + $0x10] sm:$0xff]
        %v267 = vld [vmem:[%s2 + $0x18] sm:$0xff]
        %v268 = vld [vmem:[%s2 + $0x20] sm:$0xff]
        %v269 = vld [vmem:[%s2 + $0x28] sm:$0xff]
        %v270 = vld [vmem:[%s2 + $0x30] sm:$0xff]
        %v271 = vld [vmem:[%s2 + $0x38] sm:$0xff]
        %v272 = vld [vmem:[%s2 + $0x40] sm:$0xff]
        %v273 = vld [vmem:[%s2 + $0x48] sm:$0xff]
        %v274 = vld [vmem:[%s2 + $0x50] sm:$0xff]
        %v275 = vld [vmem:[%s2 + $0x58] sm:$0xff]
        %v276 = vld [vmem:[%s2 + $0x60] sm:$0xff]
        %v277 = vld [vmem:[%s2 + $0x68] sm:$0xff]
        %v278 = vld [vmem:[%s2 + $0x70] sm:$0xff]
        %v279 = vld [vmem:[%s2 + $0x78] sm:$0xff]
        %v280 = vld [vmem:[%s2 + $0x80] sm:$0xff]
        %v281 = vld [vmem:[%s2 + $0x88] sm:$0xff]
        %v282 = vld [vmem:[%s2 + $0x90] sm:$0xff]
        %v283 = vld [vmem:[%s2 + $0x98] sm:$0xff]
        %v284 = vld [vmem:[%s2 + $0xa0] sm:$0xff]
        %v285 = vld [vmem:[%s2 + $0xa8] sm:$0xff]
        %v286 = vld [vmem:[%s2 + $0xb0] sm:$0xff]
        %v287 = vld [vmem:[%s2 + $0xb8] sm:$0xff]
        %v288 = vld [vmem:[%s2 + $0xc0] sm:$0xff]
        %v289 = vld [vmem:[%s2 + $0xc8] sm:$0xff]
        %v290 = vld [vmem:[%s2 + $0xd0] sm:$0xff]
        %v291 = vld [vmem:[%s2 + $0xd8] sm:$0xff]
        %v292 = vld [vmem:[%s2 + $0xe0] sm:$0xff]
        %v293 = vld [vmem:[%s2 + $0xe8] sm:$0xff]
        %v294 = vld [vmem:[%s2 + $0xf0] sm:$0xff]
        %v295 = vld [vmem:[%s2 + $0xf8] sm:$0xff]
        %v296 = vld [vmem:[%s2 + $0x100] sm:$0xff]
        %v297 = vld [vmem:[%s2 + $0x108] sm:$0xff]
        %v298 = vld [vmem:[%s2 + $0x110] sm:$0xff]
        %v299 = vld [vmem:[%s2 + $0x118] sm:$0xff]
        %301 = vset.pattern.permute.xlu0 0
        %302 = vperm.xlu0 %301, %v264
        %v303 = vpop.permute.xlu0 %302
        %306 = vset.pattern.permute.xlu0 0
        %307 = vperm.xlu0 %306, %v265
        %v308 = vpop.permute.xlu0 %307
        %311 = vset.pattern.permute.xlu0 0
        %312 = vperm.xlu0 %311, %v266
        %v313 = vpop.permute.xlu0 %312
        %316 = vset.pattern.permute.xlu0 0
        %317 = vperm.xlu0 %316, %v267
        %v318 = vpop.permute.xlu0 %317
        %321 = vset.pattern.permute.xlu0 0
        %322 = vperm.xlu0 %321, %v268
        %v323 = vpop.permute.xlu0 %322
        %326 = vset.pattern.permute.xlu0 0
        %327 = vperm.xlu0 %326, %v269
        %v328 = vpop.permute.xlu0 %327
        %331 = vset.pattern.permute.xlu0 0
        %332 = vperm.xlu0 %331, %v270
        %v333 = vpop.permute.xlu0 %332
        %336 = vset.pattern.permute.xlu0 0
        %337 = vperm.xlu0 %336, %v271
        %v338 = vpop.permute.xlu0 %337
        %341 = vset.pattern.permute.xlu0 0
        %342 = vperm.xlu0 %341, %v272
        %v343 = vpop.permute.xlu0 %342
        %346 = vset.pattern.permute.xlu0 0
        %347 = vperm.xlu0 %346, %v273
        %v348 = vpop.permute.xlu0 %347
        %351 = vset.pattern.permute.xlu0 0
        %352 = vperm.xlu0 %351, %v274
        %v353 = vpop.permute.xlu0 %352
        %356 = vset.pattern.permute.xlu0 0
        %357 = vperm.xlu0 %356, %v275
        %v358 = vpop.permute.xlu0 %357
        %361 = vset.pattern.permute.xlu0 0
        %362 = vperm.xlu0 %361, %v276
        %v363 = vpop.permute.xlu0 %362
        %366 = vset.pattern.permute.xlu0 0
        %367 = vperm.xlu0 %366, %v277
        %v368 = vpop.permute.xlu0 %367
        %371 = vset.pattern.permute.xlu0 0
        %372 = vperm.xlu0 %371, %v278
        %v373 = vpop.permute.xlu0 %372
        %376 = vset.pattern.permute.xlu0 0
        %377 = vperm.xlu0 %376, %v279
        %v378 = vpop.permute.xlu0 %377
        %381 = vset.pattern.permute.xlu0 0
        %382 = vperm.xlu0 %381, %v280
        %v383 = vpop.permute.xlu0 %382
        %386 = vset.pattern.permute.xlu0 0
        %387 = vperm.xlu0 %386, %v281
        %v388 = vpop.permute.xlu0 %387
        %391 = vset.pattern.permute.xlu0 0
        %392 = vperm.xlu0 %391, %v282
        %v393 = vpop.permute.xlu0 %392
        %396 = vset.pattern.permute.xlu0 0
        %397 = vperm.xlu0 %396, %v283
        %v398 = vpop.permute.xlu0 %397
        %401 = vset.pattern.permute.xlu0 0
        %402 = vperm.xlu0 %401, %v284
        %v403 = vpop.permute.xlu0 %402
        %406 = vset.pattern.permute.xlu0 0
        %407 = vperm.xlu0 %406, %v285
        %v408 = vpop.permute.xlu0 %407
        %411 = vset.pattern.permute.xlu0 0
        %412 = vperm.xlu0 %411, %v286
        %v413 = vpop.permute.xlu0 %412
        %416 = vset.pattern.permute.xlu0 0
        %417 = vperm.xlu0 %416, %v287
        %v418 = vpop.permute.xlu0 %417
        %421 = vset.pattern.permute.xlu0 0
        %422 = vperm.xlu0 %421, %v288
        %v423 = vpop.permute.xlu0 %422
        %426 = vset.pattern.permute.xlu0 0
        %427 = vperm.xlu0 %426, %v289
        %v428 = vpop.permute.xlu0 %427
        %431 = vset.pattern.permute.xlu0 0
        %432 = vperm.xlu0 %431, %v290
        %v433 = vpop.permute.xlu0 %432
        %436 = vset.pattern.permute.xlu0 0
        %437 = vperm.xlu0 %436, %v291
        %v438 = vpop.permute.xlu0 %437
        %441 = vset.pattern.permute.xlu0 0
        %442 = vperm.xlu0 %441, %v292
        %v443 = vpop.permute.xlu0 %442
        %446 = vset.pattern.permute.xlu0 0
        %447 = vperm.xlu0 %446, %v293
        %v448 = vpop.permute.xlu0 %447
        %451 = vset.pattern.permute.xlu0 0
        %452 = vperm.xlu0 %451, %v294
        %v453 = vpop.permute.xlu0 %452
        %456 = vset.pattern.permute.xlu0 0
        %457 = vperm.xlu0 %456, %v295
        %v458 = vpop.permute.xlu0 %457
        %461 = vset.pattern.permute.xlu0 0
        %462 = vperm.xlu0 %461, %v296
        %v463 = vpop.permute.xlu0 %462
        %466 = vset.pattern.permute.xlu0 0
        %467 = vperm.xlu0 %466, %v297
        %v468 = vpop.permute.xlu0 %467
        %471 = vset.pattern.permute.xlu0 0
        %472 = vperm.xlu0 %471, %v298
        %v473 = vpop.permute.xlu0 %472
        %476 = vset.pattern.permute.xlu0 0
        %477 = vperm.xlu0 %476, %v299
        %v478 = vpop.permute.xlu0 %477
        %v516 = vunpack.c.l.b16 %v228
        %v517 = vunpack.c.l.b16 %v229
        %v518 = vunpack.c.l.b16 %v230
        %v519 = vunpack.c.l.b16 %v231
        %v520 = vunpack.c.l.b16 %v232
        %v521 = vunpack.c.l.b16 %v233
        %v522 = vunpack.c.l.b16 %v234
        %v523 = vunpack.c.l.b16 %v235
        %v524 = vunpack.c.l.b16 %v236
        %v525 = vunpack.c.l.b16 %v237
        %v526 = vunpack.c.l.b16 %v238
        %v527 = vunpack.c.l.b16 %v239
        %v528 = vunpack.c.l.b16 %v240
        %v529 = vunpack.c.l.b16 %v241
        %v530 = vunpack.c.l.b16 %v242
        %v531 = vunpack.c.l.b16 %v243
        %v532 = vunpack.c.l.b16 %v244
        %v533 = vunpack.c.l.b16 %v245
        %v534 = vunpack.c.l.b16 %v246
        %v535 = vunpack.c.l.b16 %v247
        %v536 = vunpack.c.l.b16 %v248
        %v537 = vunpack.c.l.b16 %v249
        %v538 = vunpack.c.l.b16 %v250
        %v539 = vunpack.c.l.b16 %v251
        %v540 = vunpack.c.l.b16 %v252
        %v541 = vunpack.c.l.b16 %v253
        %v542 = vunpack.c.l.b16 %v254
        %v543 = vunpack.c.l.b16 %v255
        %v544 = vunpack.c.l.b16 %v256
        %v545 = vunpack.c.l.b16 %v257
        %v546 = vunpack.c.l.b16 %v258
        %v547 = vunpack.c.l.b16 %v259
        %v548 = vunpack.c.l.b16 %v260
        %v549 = vunpack.c.l.b16 %v261
        %v550 = vunpack.c.l.b16 %v262
        %v551 = vunpack.c.l.b16 %v263
        %v552 = vpack.c.b16 %v517, %v516
        %v553 = vpack.c.b16 %v519, %v518
        %v554 = vpack.c.b16 %v521, %v520
        %v555 = vpack.c.b16 %v523, %v522
        %v556 = vpack.c.b16 %v525, %v524
        %v557 = vpack.c.b16 %v527, %v526
        %v558 = vpack.c.b16 %v529, %v528
        %v559 = vpack.c.b16 %v531, %v530
        %v560 = vpack.c.b16 %v533, %v532
        %v561 = vpack.c.b16 %v535, %v534
        %v562 = vpack.c.b16 %v537, %v536
        %v563 = vpack.c.b16 %v539, %v538
        %v564 = vpack.c.b16 %v541, %v540
        %v565 = vpack.c.b16 %v543, %v542
        %v566 = vpack.c.b16 %v545, %v544
        %v567 = vpack.c.b16 %v547, %v546
        %v568 = vpack.c.b16 %v549, %v548
        %v569 = vpack.c.b16 %v551, %v550
        %v574 = vunpack.c.l.b16 %v224
        %v575 = vunpack.c.h.b16 %v224
        %v576 = vunpack.c.l.b16 %v225
        %v577 = vunpack.c.h.b16 %v225
        %v578 = vunpack.c.l.b16 %v226
        %v579 = vunpack.c.h.b16 %v226
        %v580 = vunpack.c.l.b16 %v227
        %v581 = vunpack.c.h.b16 %v227
        %v582 = vpack.c.b16 %v576, %v574
        %v583 = vpack.c.b16 %v577, %v575
        %v584 = vpack.c.b16 %v580, %v578
        %v585 = vpack.c.b16 %v581, %v579
        %vm590 = vcmask 261120
        %v592 = vsel %vm590, %v552, 0
        %v595 = vsel %vm590, %v553, 0
        %v598 = vsel %vm590, %v554, 0
        %v601 = vsel %vm590, %v555, 0
        %v604 = vsel %vm590, %v556, 0
        %v607 = vsel %vm590, %v557, 0
        %v610 = vsel %vm590, %v558, 0
        %v613 = vsel %vm590, %v559, 0
        %v616 = vsel %vm590, %v560, 0
        %v619 = vsel %vm590, %v561, 0
        %v622 = vsel %vm590, %v562, 0
        %v625 = vsel %vm590, %v563, 0
        %v628 = vsel %vm590, %v564, 0
        %v631 = vsel %vm590, %v565, 0
        %v634 = vsel %vm590, %v566, 0
        %v637 = vsel %vm590, %v567, 0
        %v640 = vsel %vm590, %v568, 0
        %v643 = vsel %vm590, %v569, 0
        %645 = vmatpush.bf16.msra.mxu0 0
        %646 = vmatpush.bf16.msra.mxu0 0
        %647 = vmatpush.bf16.msra.mxu0 0
        %648 = vmatpush.bf16.msra.mxu0 0
        %649 = vmatpush.bf16.msra.mxu0 0
        %650 = vmatpush.bf16.msra.mxu0 0
        %651 = vmatpush.bf16.msra.mxu0 %v584
        %652 = vmatpush.bf16.msra.mxu0 %v582
        %653 = vmatmul.bf16.gmra.mxu0 %v592
        %v654 = vpop.f32.mrf.mxu0
        %v655 = vadd.f32 %v303, %v654
        %v656 = vpop.f32.mrf.mxu0
        %v657 = vadd.f32 %v308, %v656
        %658 = vmatmul.bf16.gmra.mxu0 %v595
        %v659 = vpop.f32.mrf.mxu0
        %v660 = vadd.f32 %v313, %v659
        %v661 = vpop.f32.mrf.mxu0
        %v662 = vadd.f32 %v318, %v661
        %663 = vmatmul.bf16.gmra.mxu0 %v598
        %v664 = vpop.f32.mrf.mxu0
        %v665 = vadd.f32 %v323, %v664
        %v666 = vpop.f32.mrf.mxu0
        %v667 = vadd.f32 %v328, %v666
        %668 = vmatmul.bf16.gmra.mxu0 %v601
        %v669 = vpop.f32.mrf.mxu0
        %v670 = vadd.f32 %v333, %v669
        %v671 = vpop.f32.mrf.mxu0
        %v672 = vadd.f32 %v338, %v671
        %673 = vmatmul.bf16.gmra.mxu0 %v604
        %v674 = vpop.f32.mrf.mxu0
        %v675 = vadd.f32 %v343, %v674
        %v676 = vpop.f32.mrf.mxu0
        %v677 = vadd.f32 %v348, %v676
        %678 = vmatmul.bf16.gmra.mxu0 %v607
        %v679 = vpop.f32.mrf.mxu0
        %v680 = vadd.f32 %v353, %v679
        %v681 = vpop.f32.mrf.mxu0
        %v682 = vadd.f32 %v358, %v681
        %683 = vmatmul.bf16.gmra.mxu0 %v610
        %v684 = vpop.f32.mrf.mxu0
        %v685 = vadd.f32 %v363, %v684
        %v686 = vpop.f32.mrf.mxu0
        %v687 = vadd.f32 %v368, %v686
        %688 = vmatmul.bf16.gmra.mxu0 %v613
        %v689 = vpop.f32.mrf.mxu0
        %v690 = vadd.f32 %v373, %v689
        %v691 = vpop.f32.mrf.mxu0
        %v692 = vadd.f32 %v378, %v691
        %693 = vmatmul.bf16.gmra.mxu0 %v616
        %v694 = vpop.f32.mrf.mxu0
        %v695 = vadd.f32 %v383, %v694
        %v696 = vpop.f32.mrf.mxu0
        %v697 = vadd.f32 %v388, %v696
        %698 = vmatmul.bf16.gmra.mxu0 %v619
        %v699 = vpop.f32.mrf.mxu0
        %v700 = vadd.f32 %v393, %v699
        %v701 = vpop.f32.mrf.mxu0
        %v702 = vadd.f32 %v398, %v701
        %703 = vmatmul.bf16.gmra.mxu0 %v622
        %v704 = vpop.f32.mrf.mxu0
        %v705 = vadd.f32 %v403, %v704
        %v706 = vpop.f32.mrf.mxu0
        %v707 = vadd.f32 %v408, %v706
        %708 = vmatmul.bf16.gmra.mxu0 %v625
        %v709 = vpop.f32.mrf.mxu0
        %v710 = vadd.f32 %v413, %v709
        %v711 = vpop.f32.mrf.mxu0
        %v712 = vadd.f32 %v418, %v711
        %713 = vmatmul.bf16.gmra.mxu0 %v628
        %v714 = vpop.f32.mrf.mxu0
        %v715 = vadd.f32 %v423, %v714
        %v716 = vpop.f32.mrf.mxu0
        %v717 = vadd.f32 %v428, %v716
        %718 = vmatmul.bf16.gmra.mxu0 %v631
        %v719 = vpop.f32.mrf.mxu0
        %v720 = vadd.f32 %v433, %v719
        %v721 = vpop.f32.mrf.mxu0
        %v722 = vadd.f32 %v438, %v721
        %723 = vmatmul.bf16.gmra.mxu0 %v634
        %v724 = vpop.f32.mrf.mxu0
        %v725 = vadd.f32 %v443, %v724
        %v726 = vpop.f32.mrf.mxu0
        %v727 = vadd.f32 %v448, %v726
        %728 = vmatmul.bf16.gmra.mxu0 %v637
        %v729 = vpop.f32.mrf.mxu0
        %v730 = vadd.f32 %v453, %v729
        %v731 = vpop.f32.mrf.mxu0
        %v732 = vadd.f32 %v458, %v731
        %733 = vmatmul.bf16.gmra.mxu0 %v640
        %v734 = vpop.f32.mrf.mxu0
        %v735 = vadd.f32 %v463, %v734
        %v736 = vpop.f32.mrf.mxu0
        %v737 = vadd.f32 %v468, %v736
        %738 = vmatmul.bf16.gmra.mxu0 %v643
        %v739 = vpop.f32.mrf.mxu0
        %v740 = vadd.f32 %v473, %v739
        %v741 = vpop.f32.mrf.mxu0
        %v742 = vadd.f32 %v478, %v741
        %743 = vdwg.mxu0
        %744 = vmatpush.bf16.msra.mxu0 0
        %745 = vmatpush.bf16.msra.mxu0 0
        %746 = vmatpush.bf16.msra.mxu0 0
        %747 = vmatpush.bf16.msra.mxu0 0
        %748 = vmatpush.bf16.msra.mxu0 0
        %749 = vmatpush.bf16.msra.mxu0 0
        %750 = vmatpush.bf16.msra.mxu0 %v585
        %751 = vmatpush.bf16.msra.mxu0 %v583
        %752 = vmatmul.bf16.gmra.mxu0 %v592
        %v753 = vpop.f32.mrf.mxu0
        %v754 = vadd.f32 %v303, %v753
        %v755 = vpop.f32.mrf.mxu0
        %v756 = vadd.f32 %v308, %v755
        %757 = vmatmul.bf16.gmra.mxu0 %v595
        %v758 = vpop.f32.mrf.mxu0
        %v759 = vadd.f32 %v313, %v758
        %v760 = vpop.f32.mrf.mxu0
        %v761 = vadd.f32 %v318, %v760
        %762 = vmatmul.bf16.gmra.mxu0 %v598
        %v763 = vpop.f32.mrf.mxu0
        %v764 = vadd.f32 %v323, %v763
        %v765 = vpop.f32.mrf.mxu0
        %v766 = vadd.f32 %v328, %v765
        %767 = vmatmul.bf16.gmra.mxu0 %v601
        %v768 = vpop.f32.mrf.mxu0
        %v769 = vadd.f32 %v333, %v768
        %v770 = vpop.f32.mrf.mxu0
        %v771 = vadd.f32 %v338, %v770
        %772 = vmatmul.bf16.gmra.mxu0 %v604
        %v773 = vpop.f32.mrf.mxu0
        %v774 = vadd.f32 %v343, %v773
        %v775 = vpop.f32.mrf.mxu0
        %v776 = vadd.f32 %v348, %v775
        %777 = vmatmul.bf16.gmra.mxu0 %v607
        %v778 = vpop.f32.mrf.mxu0
        %v779 = vadd.f32 %v353, %v778
        %v780 = vpop.f32.mrf.mxu0
        %v781 = vadd.f32 %v358, %v780
        %782 = vmatmul.bf16.gmra.mxu0 %v610
        %v783 = vpop.f32.mrf.mxu0
        %v784 = vadd.f32 %v363, %v783
        %v785 = vpop.f32.mrf.mxu0
        %v786 = vadd.f32 %v368, %v785
        %787 = vmatmul.bf16.gmra.mxu0 %v613
        %v788 = vpop.f32.mrf.mxu0
        %v789 = vadd.f32 %v373, %v788
        %v790 = vpop.f32.mrf.mxu0
        %v791 = vadd.f32 %v378, %v790
        %792 = vmatmul.bf16.gmra.mxu0 %v616
        %v793 = vpop.f32.mrf.mxu0
        %v794 = vadd.f32 %v383, %v793
        %v795 = vpop.f32.mrf.mxu0
        %v796 = vadd.f32 %v388, %v795
        %797 = vmatmul.bf16.gmra.mxu0 %v619
        %v798 = vpop.f32.mrf.mxu0
        %v799 = vadd.f32 %v393, %v798
        %v800 = vpop.f32.mrf.mxu0
        %v801 = vadd.f32 %v398, %v800
        %802 = vmatmul.bf16.gmra.mxu0 %v622
        %v803 = vpop.f32.mrf.mxu0
        %v804 = vadd.f32 %v403, %v803
        %v805 = vpop.f32.mrf.mxu0
        %v806 = vadd.f32 %v408, %v805
        %807 = vmatmul.bf16.gmra.mxu0 %v625
        %v808 = vpop.f32.mrf.mxu0
        %v809 = vadd.f32 %v413, %v808
        %v810 = vpop.f32.mrf.mxu0
        %v811 = vadd.f32 %v418, %v810
        %812 = vmatmul.bf16.gmra.mxu0 %v628
        %v813 = vpop.f32.mrf.mxu0
        %v814 = vadd.f32 %v423, %v813
        %v815 = vpop.f32.mrf.mxu0
        %v816 = vadd.f32 %v428, %v815
        %817 = vmatmul.bf16.gmra.mxu0 %v631
        %v818 = vpop.f32.mrf.mxu0
        %v819 = vadd.f32 %v433, %v818
        %v820 = vpop.f32.mrf.mxu0
        %v821 = vadd.f32 %v438, %v820
        %822 = vmatmul.bf16.gmra.mxu0 %v634
        %v823 = vpop.f32.mrf.mxu0
        %v824 = vadd.f32 %v443, %v823
        %v825 = vpop.f32.mrf.mxu0
        %v826 = vadd.f32 %v448, %v825
        %827 = vmatmul.bf16.gmra.mxu0 %v637
        %v828 = vpop.f32.mrf.mxu0
        %v829 = vadd.f32 %v453, %v828
        %v830 = vpop.f32.mrf.mxu0
        %v831 = vadd.f32 %v458, %v830
        %832 = vmatmul.bf16.gmra.mxu0 %v640
        %v833 = vpop.f32.mrf.mxu0
        %v834 = vadd.f32 %v463, %v833
        %v835 = vpop.f32.mrf.mxu0
        %v836 = vadd.f32 %v468, %v835
        %837 = vmatmul.bf16.gmra.mxu0 %v643
        %v838 = vpop.f32.mrf.mxu0
        %v839 = vadd.f32 %v473, %v838
        %v840 = vpop.f32.mrf.mxu0
        %v841 = vadd.f32 %v478, %v840
        %842 = vdwg.mxu0
        %843 = vxpose.xlu0.b32.start [1/16] %v655, 128
        %844 = vxpose.xlu0.b32.cont [2/16] %v657, 128
        %845 = vxpose.xlu0.b32.cont [3/16] %v660, 128
        %846 = vxpose.xlu0.b32.cont [4/16] %v662, 128
        %847 = vxpose.xlu0.b32.cont [5/16] %v665, 128
        %848 = vxpose.xlu0.b32.cont [6/16] %v667, 128
        %849 = vxpose.xlu0.b32.cont [7/16] %v670, 128
        %850 = vxpose.xlu0.b32.cont [8/16] %v672, 128
        %851 = vxpose.xlu0.b32.cont [9/16] %v675, 128
        %852 = vxpose.xlu0.b32.cont [10/16] %v677, 128
        %853 = vxpose.xlu0.b32.cont [11/16] %v680, 128
        %854 = vxpose.xlu0.b32.cont [12/16] %v682, 128
        %855 = vxpose.xlu0.b32.cont [13/16] %v685, 128
        %856 = vxpose.xlu0.b32.cont [14/16] %v687, 128
        %857 = vxpose.xlu0.b32.cont [15/16] %v690, 128
        %858 = vxpose.xlu0.b32.end [16/16] %v692, 128
        %v859 = vpop.trf.xlu0
        %v860 = vpop.trf.xlu0
        %v861 = vpop.trf.xlu0
        %v862 = vpop.trf.xlu0
        %v863 = vpop.trf.xlu0
        %v864 = vpop.trf.xlu0
        %v865 = vpop.trf.xlu0
        %v866 = vpop.trf.xlu0
        %v867 = vpop.trf.xlu0
        %v868 = vpop.trf.xlu0
        %v869 = vpop.trf.xlu0
        %v870 = vpop.trf.xlu0
        %v871 = vpop.trf.xlu0
        %v872 = vpop.trf.xlu0
        %v873 = vpop.trf.xlu0
        %v874 = vpop.trf.xlu0
        %875 = vxpose.xlu0.b32.start [1/16] %v754, 128
        %876 = vxpose.xlu0.b32.cont [2/16] %v756, 128
        %877 = vxpose.xlu0.b32.cont [3/16] %v759, 128
        %878 = vxpose.xlu0.b32.cont [4/16] %v761, 128
        %879 = vxpose.xlu0.b32.cont [5/16] %v764, 128
        %880 = vxpose.xlu0.b32.cont [6/16] %v766, 128
        %881 = vxpose.xlu0.b32.cont [7/16] %v769, 128
        %882 = vxpose.xlu0.b32.cont [8/16] %v771, 128
        %883 = vxpose.xlu0.b32.cont [9/16] %v774, 128
        %884 = vxpose.xlu0.b32.cont [10/16] %v776, 128
        %885 = vxpose.xlu0.b32.cont [11/16] %v779, 128
        %886 = vxpose.xlu0.b32.cont [12/16] %v781, 128
        %887 = vxpose.xlu0.b32.cont [13/16] %v784, 128
        %888 = vxpose.xlu0.b32.cont [14/16] %v786, 128
        %889 = vxpose.xlu0.b32.cont [15/16] %v789, 128
        %890 = vxpose.xlu0.b32.end [16/16] %v791, 128
        %v891 = vpop.trf.xlu0
        %v892 = vpop.trf.xlu0
        %v893 = vpop.trf.xlu0
        %v894 = vpop.trf.xlu0
        %v895 = vpop.trf.xlu0
        %v896 = vpop.trf.xlu0
        %v897 = vpop.trf.xlu0
        %v898 = vpop.trf.xlu0
        %v899 = vpop.trf.xlu0
        %v900 = vpop.trf.xlu0
        %v901 = vpop.trf.xlu0
        %v902 = vpop.trf.xlu0
        %v903 = vpop.trf.xlu0
        %v904 = vpop.trf.xlu0
        %v905 = vpop.trf.xlu0
        %v906 = vpop.trf.xlu0
        %v907 = vpack.c.bf16 %v860, %v859
        %v908 = vpack.c.bf16 %v862, %v861
        %v909 = vpack.c.bf16 %v864, %v863
        %v910 = vpack.c.bf16 %v866, %v865
        %v911 = vpack.c.bf16 %v868, %v867
        %v912 = vpack.c.bf16 %v870, %v869
        %v913 = vpack.c.bf16 %v872, %v871
        %v914 = vpack.c.bf16 %v874, %v873
        %v915 = vpack.c.bf16 %v892, %v891
        %v916 = vpack.c.bf16 %v894, %v893
        %v917 = vpack.c.bf16 %v896, %v895
        %v918 = vpack.c.bf16 %v898, %v897
        %v919 = vpack.c.bf16 %v900, %v899
        %v920 = vpack.c.bf16 %v902, %v901
        %v921 = vpack.c.bf16 %v904, %v903
        %v922 = vpack.c.bf16 %v906, %v905
        %v923 = vpack.c.bf16 %v697, %v695
        %v924 = vpack.c.bf16 %v796, %v794
        %v925 = vpack.c.bf16 %v702, %v700
        %v926 = vpack.c.bf16 %v801, %v799
        %v927 = vpack.c.bf16 %v707, %v705
        %v928 = vpack.c.bf16 %v806, %v804
        %v929 = vpack.c.bf16 %v712, %v710
        %v930 = vpack.c.bf16 %v811, %v809
        %v931 = vpack.c.bf16 %v717, %v715
        %v932 = vpack.c.bf16 %v816, %v814
        %v933 = vpack.c.bf16 %v722, %v720
        %v934 = vpack.c.bf16 %v821, %v819
        %v935 = vpack.c.bf16 %v727, %v725
        %v936 = vpack.c.bf16 %v826, %v824
        %v937 = vpack.c.bf16 %v732, %v730
        %v938 = vpack.c.bf16 %v831, %v829
        %939 = vmatpush.bf16.msra.mxu0 %v937
        %940 = vmatpush.bf16.msra.mxu0 %v935
        %941 = vmatpush.bf16.msra.mxu0 %v933
        %942 = vmatpush.bf16.msra.mxu0 %v931
        %943 = vmatpush.bf16.msra.mxu0 %v929
        %944 = vmatpush.bf16.msra.mxu0 %v927
        %945 = vmatpush.bf16.msra.mxu0 %v925
        %946 = vmatpush.bf16.msra.mxu0 %v923
        %947 = vmatmul.bf16.gmra.mxu0 %v907
        %v948 = vpop.f32.mrf.mxu0
        %v949 = vadd.f32 0.0, %v948
        %v950 = vpop.f32.mrf.mxu0
        %v951 = vadd.f32 0.0, %v950
        %952 = vmatmul.bf16.gmra.mxu0 %v908
        %v953 = vpop.f32.mrf.mxu0
        %v954 = vadd.f32 0.0, %v953
        %v955 = vpop.f32.mrf.mxu0
        %v956 = vadd.f32 0.0, %v955
        %957 = vmatmul.bf16.gmra.mxu0 %v909
        %v958 = vpop.f32.mrf.mxu0
        %v959 = vadd.f32 0.0, %v958
        %v960 = vpop.f32.mrf.mxu0
        %v961 = vadd.f32 0.0, %v960
        %962 = vmatmul.bf16.gmra.mxu0 %v910
        %v963 = vpop.f32.mrf.mxu0
        %v964 = vadd.f32 0.0, %v963
        %v965 = vpop.f32.mrf.mxu0
        %v966 = vadd.f32 0.0, %v965
        %967 = vmatmul.bf16.gmra.mxu0 %v911
        %v968 = vpop.f32.mrf.mxu0
        %v969 = vadd.f32 0.0, %v968
        %v970 = vpop.f32.mrf.mxu0
        %v971 = vadd.f32 0.0, %v970
        %972 = vmatmul.bf16.gmra.mxu0 %v912
        %v973 = vpop.f32.mrf.mxu0
        %v974 = vadd.f32 0.0, %v973
        %v975 = vpop.f32.mrf.mxu0
        %v976 = vadd.f32 0.0, %v975
        %977 = vmatmul.bf16.gmra.mxu0 %v913
        %v978 = vpop.f32.mrf.mxu0
        %v979 = vadd.f32 0.0, %v978
        %v980 = vpop.f32.mrf.mxu0
        %v981 = vadd.f32 0.0, %v980
        %982 = vmatmul.bf16.gmra.mxu0 %v914
        %v983 = vpop.f32.mrf.mxu0
        %v984 = vadd.f32 0.0, %v983
        %v985 = vpop.f32.mrf.mxu0
        %v986 = vadd.f32 0.0, %v985
        %987 = vmatmul.bf16.gmra.mxu0 %v915
        %v988 = vpop.f32.mrf.mxu0
        %v989 = vadd.f32 0.0, %v988
        %v990 = vpop.f32.mrf.mxu0
        %v991 = vadd.f32 0.0, %v990
        %992 = vmatmul.bf16.gmra.mxu0 %v916
        %v993 = vpop.f32.mrf.mxu0
        %v994 = vadd.f32 0.0, %v993
        %v995 = vpop.f32.mrf.mxu0
        %v996 = vadd.f32 0.0, %v995
        %997 = vmatmul.bf16.gmra.mxu0 %v917
        %v998 = vpop.f32.mrf.mxu0
        %v999 = vadd.f32 0.0, %v998
        %v1000 = vpop.f32.mrf.mxu0
        %v1001 = vadd.f32 0.0, %v1000
        %1002 = vmatmul.bf16.gmra.mxu0 %v918
        %v1003 = vpop.f32.mrf.mxu0
        %v1004 = vadd.f32 0.0, %v1003
        %v1005 = vpop.f32.mrf.mxu0
        %v1006 = vadd.f32 0.0, %v1005
        %1007 = vmatmul.bf16.gmra.mxu0 %v919
        %v1008 = vpop.f32.mrf.mxu0
        %v1009 = vadd.f32 0.0, %v1008
        %v1010 = vpop.f32.mrf.mxu0
        %v1011 = vadd.f32 0.0, %v1010
        %1012 = vmatmul.bf16.gmra.mxu0 %v920
        %v1013 = vpop.f32.mrf.mxu0
        %v1014 = vadd.f32 0.0, %v1013
        %v1015 = vpop.f32.mrf.mxu0
        %v1016 = vadd.f32 0.0, %v1015
        %1017 = vmatmul.bf16.gmra.mxu0 %v921
        %v1018 = vpop.f32.mrf.mxu0
        %v1019 = vadd.f32 0.0, %v1018
        %v1020 = vpop.f32.mrf.mxu0
        %v1021 = vadd.f32 0.0, %v1020
        %1022 = vmatmul.bf16.gmra.mxu0 %v922
        %v1023 = vpop.f32.mrf.mxu0
        %v1024 = vadd.f32 0.0, %v1023
        %v1025 = vpop.f32.mrf.mxu0
        %v1026 = vadd.f32 0.0, %v1025
        %1027 = vdwg.mxu0
        %1028 = vmatpush.bf16.msra.mxu0 %v938
        %1029 = vmatpush.bf16.msra.mxu0 %v936
        %1030 = vmatpush.bf16.msra.mxu0 %v934
        %1031 = vmatpush.bf16.msra.mxu0 %v932
        %1032 = vmatpush.bf16.msra.mxu0 %v930
        %1033 = vmatpush.bf16.msra.mxu0 %v928
        %1034 = vmatpush.bf16.msra.mxu0 %v926
        %1035 = vmatpush.bf16.msra.mxu0 %v924
        %1036 = vmatmul.bf16.gmra.mxu0 %v907
        %v1037 = vpop.f32.mrf.mxu0
        %v1038 = vadd.f32 0.0, %v1037
        %v1039 = vpop.f32.mrf.mxu0
        %v1040 = vadd.f32 0.0, %v1039
        %1041 = vmatmul.bf16.gmra.mxu0 %v908
        %v1042 = vpop.f32.mrf.mxu0
        %v1043 = vadd.f32 0.0, %v1042
        %v1044 = vpop.f32.mrf.mxu0
        %v1045 = vadd.f32 0.0, %v1044
        %1046 = vmatmul.bf16.gmra.mxu0 %v909
        %v1047 = vpop.f32.mrf.mxu0
        %v1048 = vadd.f32 0.0, %v1047
        %v1049 = vpop.f32.mrf.mxu0
        %v1050 = vadd.f32 0.0, %v1049
        %1051 = vmatmul.bf16.gmra.mxu0 %v910
        %v1052 = vpop.f32.mrf.mxu0
        %v1053 = vadd.f32 0.0, %v1052
        %v1054 = vpop.f32.mrf.mxu0
        %v1055 = vadd.f32 0.0, %v1054
        %1056 = vmatmul.bf16.gmra.mxu0 %v911
        %v1057 = vpop.f32.mrf.mxu0
        %v1058 = vadd.f32 0.0, %v1057
        %v1059 = vpop.f32.mrf.mxu0
        %v1060 = vadd.f32 0.0, %v1059
        %1061 = vmatmul.bf16.gmra.mxu0 %v912
        %v1062 = vpop.f32.mrf.mxu0
        %v1063 = vadd.f32 0.0, %v1062
        %v1064 = vpop.f32.mrf.mxu0
        %v1065 = vadd.f32 0.0, %v1064
        %1066 = vmatmul.bf16.gmra.mxu0 %v913
        %v1067 = vpop.f32.mrf.mxu0
        %v1068 = vadd.f32 0.0, %v1067
        %v1069 = vpop.f32.mrf.mxu0
        %v1070 = vadd.f32 0.0, %v1069
        %1071 = vmatmul.bf16.gmra.mxu0 %v914
        %v1072 = vpop.f32.mrf.mxu0
        %v1073 = vadd.f32 0.0, %v1072
        %v1074 = vpop.f32.mrf.mxu0
        %v1075 = vadd.f32 0.0, %v1074
        %1076 = vmatmul.bf16.gmra.mxu0 %v915
        %v1077 = vpop.f32.mrf.mxu0
        %v1078 = vadd.f32 0.0, %v1077
        %v1079 = vpop.f32.mrf.mxu0
        %v1080 = vadd.f32 0.0, %v1079
        %1081 = vmatmul.bf16.gmra.mxu0 %v916
        %v1082 = vpop.f32.mrf.mxu0
        %v1083 = vadd.f32 0.0, %v1082
        %v1084 = vpop.f32.mrf.mxu0
        %v1085 = vadd.f32 0.0, %v1084
        %1086 = vmatmul.bf16.gmra.mxu0 %v917
        %v1087 = vpop.f32.mrf.mxu0
        %v1088 = vadd.f32 0.0, %v1087
        %v1089 = vpop.f32.mrf.mxu0
        %v1090 = vadd.f32 0.0, %v1089
        %1091 = vmatmul.bf16.gmra.mxu0 %v918
        %v1092 = vpop.f32.mrf.mxu0
        %v1093 = vadd.f32 0.0, %v1092
        %v1094 = vpop.f32.mrf.mxu0
        %v1095 = vadd.f32 0.0, %v1094
        %1096 = vmatmul.bf16.gmra.mxu0 %v919
        %v1097 = vpop.f32.mrf.mxu0
        %v1098 = vadd.f32 0.0, %v1097
        %v1099 = vpop.f32.mrf.mxu0
        %v1100 = vadd.f32 0.0, %v1099
        %1101 = vmatmul.bf16.gmra.mxu0 %v920
        %v1102 = vpop.f32.mrf.mxu0
        %v1103 = vadd.f32 0.0, %v1102
        %v1104 = vpop.f32.mrf.mxu0
        %v1105 = vadd.f32 0.0, %v1104
        %1106 = vmatmul.bf16.gmra.mxu0 %v921
        %v1107 = vpop.f32.mrf.mxu0
        %v1108 = vadd.f32 0.0, %v1107
        %v1109 = vpop.f32.mrf.mxu0
        %v1110 = vadd.f32 0.0, %v1109
        %1111 = vmatmul.bf16.gmra.mxu0 %v922
        %v1112 = vpop.f32.mrf.mxu0
        %v1113 = vadd.f32 0.0, %v1112
        %v1114 = vpop.f32.mrf.mxu0
        %v1115 = vadd.f32 0.0, %v1114
        %1116 = vdwg.mxu0
        %v1117 = vmax.f32 %v949, %v1038
        %1118 = vmax.xlane.f32.xlu0 %v1117
        %v1119 = vpop.xlane.xlu0 %1118
        %v1120 = vmax.f32 %v951, %v1040
        %1121 = vmax.xlane.f32.xlu0 %v1120
        %v1122 = vpop.xlane.xlu0 %1121
        %v1123 = vmax.f32 %v954, %v1043
        %1124 = vmax.xlane.f32.xlu0 %v1123
        %v1125 = vpop.xlane.xlu0 %1124
        %v1126 = vmax.f32 %v956, %v1045
        %1127 = vmax.xlane.f32.xlu0 %v1126
        %v1128 = vpop.xlane.xlu0 %1127
        %v1129 = vmax.f32 %v959, %v1048
        %1130 = vmax.xlane.f32.xlu0 %v1129
        %v1131 = vpop.xlane.xlu0 %1130
        %v1132 = vmax.f32 %v961, %v1050
        %1133 = vmax.xlane.f32.xlu0 %v1132
        %v1134 = vpop.xlane.xlu0 %1133
        %v1135 = vmax.f32 %v964, %v1053
        %1136 = vmax.xlane.f32.xlu0 %v1135
        %v1137 = vpop.xlane.xlu0 %1136
        %v1138 = vmax.f32 %v966, %v1055
        %1139 = vmax.xlane.f32.xlu0 %v1138
        %v1140 = vpop.xlane.xlu0 %1139
        %v1141 = vmax.f32 %v969, %v1058
        %1142 = vmax.xlane.f32.xlu0 %v1141
        %v1143 = vpop.xlane.xlu0 %1142
        %v1144 = vmax.f32 %v971, %v1060
        %1145 = vmax.xlane.f32.xlu0 %v1144
        %v1146 = vpop.xlane.xlu0 %1145
        %v1147 = vmax.f32 %v974, %v1063
        %1148 = vmax.xlane.f32.xlu0 %v1147
        %v1149 = vpop.xlane.xlu0 %1148
        %v1150 = vmax.f32 %v976, %v1065
        %1151 = vmax.xlane.f32.xlu0 %v1150
        %v1152 = vpop.xlane.xlu0 %1151
        %v1153 = vmax.f32 %v979, %v1068
        %1154 = vmax.xlane.f32.xlu0 %v1153
        %v1155 = vpop.xlane.xlu0 %1154
        %v1156 = vmax.f32 %v981, %v1070
        %1157 = vmax.xlane.f32.xlu0 %v1156
        %v1158 = vpop.xlane.xlu0 %1157
        %v1159 = vmax.f32 %v984, %v1073
        %1160 = vmax.xlane.f32.xlu0 %v1159
        %v1161 = vpop.xlane.xlu0 %1160
        %v1162 = vmax.f32 %v986, %v1075
        %1163 = vmax.xlane.f32.xlu0 %v1162
        %v1164 = vpop.xlane.xlu0 %1163
        %v1165 = vmax.f32 %v989, %v1078
        %1166 = vmax.xlane.f32.xlu0 %v1165
        %v1167 = vpop.xlane.xlu0 %1166
        %v1168 = vmax.f32 %v991, %v1080
        %1169 = vmax.xlane.f32.xlu0 %v1168
        %v1170 = vpop.xlane.xlu0 %1169
        %v1171 = vmax.f32 %v994, %v1083
        %1172 = vmax.xlane.f32.xlu0 %v1171
        %v1173 = vpop.xlane.xlu0 %1172
        %v1174 = vmax.f32 %v996, %v1085
        %1175 = vmax.xlane.f32.xlu0 %v1174
        %v1176 = vpop.xlane.xlu0 %1175
        %v1177 = vmax.f32 %v999, %v1088
        %1178 = vmax.xlane.f32.xlu0 %v1177
        %v1179 = vpop.xlane.xlu0 %1178
        %v1180 = vmax.f32 %v1001, %v1090
        %1181 = vmax.xlane.f32.xlu0 %v1180
        %v1182 = vpop.xlane.xlu0 %1181
        %v1183 = vmax.f32 %v1004, %v1093
        %1184 = vmax.xlane.f32.xlu0 %v1183
        %v1185 = vpop.xlane.xlu0 %1184
        %v1186 = vmax.f32 %v1006, %v1095
        %1187 = vmax.xlane.f32.xlu0 %v1186
        %v1188 = vpop.xlane.xlu0 %1187
        %v1189 = vmax.f32 %v1009, %v1098
        %1190 = vmax.xlane.f32.xlu0 %v1189
        %v1191 = vpop.xlane.xlu0 %1190
        %v1192 = vmax.f32 %v1011, %v1100
        %1193 = vmax.xlane.f32.xlu0 %v1192
        %v1194 = vpop.xlane.xlu0 %1193
        %v1195 = vmax.f32 %v1014, %v1103
        %1196 = vmax.xlane.f32.xlu0 %v1195
        %v1197 = vpop.xlane.xlu0 %1196
        %v1198 = vmax.f32 %v1016, %v1105
        %1199 = vmax.xlane.f32.xlu0 %v1198
        %v1200 = vpop.xlane.xlu0 %1199
        %v1201 = vmax.f32 %v1019, %v1108
        %1202 = vmax.xlane.f32.xlu0 %v1201
        %v1203 = vpop.xlane.xlu0 %1202
        %v1204 = vmax.f32 %v1021, %v1110
        %1205 = vmax.xlane.f32.xlu0 %v1204
        %v1206 = vpop.xlane.xlu0 %1205
        %v1207 = vmax.f32 %v1024, %v1113
        %1208 = vmax.xlane.f32.xlu0 %v1207
        %v1209 = vpop.xlane.xlu0 %1208
        %v1210 = vmax.f32 %v1026, %v1115
        %1211 = vmax.xlane.f32.xlu0 %v1210
        %v1212 = vpop.xlane.xlu0 %1211
        %v1213 = vsub.f32 %v949, %v1119
        %v1214 = vsub.f32 %v1038, %v1119
        %v1215 = vsub.f32 %v951, %v1122
        %v1216 = vsub.f32 %v1040, %v1122
        %v1217 = vsub.f32 %v954, %v1125
        %v1218 = vsub.f32 %v1043, %v1125
        %v1219 = vsub.f32 %v956, %v1128
        %v1220 = vsub.f32 %v1045, %v1128
        %v1221 = vsub.f32 %v959, %v1131
        %v1222 = vsub.f32 %v1048, %v1131
        %v1223 = vsub.f32 %v961, %v1134
        %v1224 = vsub.f32 %v1050, %v1134
        %v1225 = vsub.f32 %v964, %v1137
        %v1226 = vsub.f32 %v1053, %v1137
        %v1227 = vsub.f32 %v966, %v1140
        %v1228 = vsub.f32 %v1055, %v1140
        %v1229 = vsub.f32 %v969, %v1143
        %v1230 = vsub.f32 %v1058, %v1143
        %v1231 = vsub.f32 %v971, %v1146
        %v1232 = vsub.f32 %v1060, %v1146
        %v1233 = vsub.f32 %v974, %v1149
        %v1234 = vsub.f32 %v1063, %v1149
        %v1235 = vsub.f32 %v976, %v1152
        %v1236 = vsub.f32 %v1065, %v1152
        %v1237 = vsub.f32 %v979, %v1155
        %v1238 = vsub.f32 %v1068, %v1155
        %v1239 = vsub.f32 %v981, %v1158
        %v1240 = vsub.f32 %v1070, %v1158
        %v1241 = vsub.f32 %v984, %v1161
        %v1242 = vsub.f32 %v1073, %v1161
        %v1243 = vsub.f32 %v986, %v1164
        %v1244 = vsub.f32 %v1075, %v1164
        %v1245 = vsub.f32 %v989, %v1167
        %v1246 = vsub.f32 %v1078, %v1167
        %v1247 = vsub.f32 %v991, %v1170
        %v1248 = vsub.f32 %v1080, %v1170
        %v1249 = vsub.f32 %v994, %v1173
        %v1250 = vsub.f32 %v1083, %v1173
        %v1251 = vsub.f32 %v996, %v1176
        %v1252 = vsub.f32 %v1085, %v1176
        %v1253 = vsub.f32 %v999, %v1179
        %v1254 = vsub.f32 %v1088, %v1179
        %v1255 = vsub.f32 %v1001, %v1182
        %v1256 = vsub.f32 %v1090, %v1182
        %v1257 = vsub.f32 %v1004, %v1185
        %v1258 = vsub.f32 %v1093, %v1185
        %v1259 = vsub.f32 %v1006, %v1188
        %v1260 = vsub.f32 %v1095, %v1188
        %v1261 = vsub.f32 %v1009, %v1191
        %v1262 = vsub.f32 %v1098, %v1191
        %v1263 = vsub.f32 %v1011, %v1194
        %v1264 = vsub.f32 %v1100, %v1194
        %v1265 = vsub.f32 %v1014, %v1197
        %v1266 = vsub.f32 %v1103, %v1197
        %v1267 = vsub.f32 %v1016, %v1200
        %v1268 = vsub.f32 %v1105, %v1200
        %v1269 = vsub.f32 %v1019, %v1203
        %v1270 = vsub.f32 %v1108, %v1203
        %v1271 = vsub.f32 %v1021, %v1206
        %v1272 = vsub.f32 %v1110, %v1206
        %v1273 = vsub.f32 %v1024, %v1209
        %v1274 = vsub.f32 %v1113, %v1209
        %v1275 = vsub.f32 %v1026, %v1212
        %v1276 = vsub.f32 %v1115, %v1212
        %v1277 = vmul.f32 %v1213, 1.442695
        %v1278 = vpow.pop %v1277
        %v1279 = vmul.f32 %v1214, 1.442695
        %v1280 = vpow.pop %v1279
        %v1281 = vmul.f32 %v1215, 1.442695
        %v1282 = vpow.pop %v1281
        %v1283 = vmul.f32 %v1216, 1.442695
        %v1284 = vpow.pop %v1283
        %v1285 = vmul.f32 %v1217, 1.442695
        %v1286 = vpow.pop %v1285
        %v1287 = vmul.f32 %v1218, 1.442695
        %v1288 = vpow.pop %v1287
        %v1289 = vmul.f32 %v1219, 1.442695
        %v1290 = vpow.pop %v1289
        %v1291 = vmul.f32 %v1220, 1.442695
        %v1292 = vpow.pop %v1291
        %v1293 = vmul.f32 %v1221, 1.442695
        %v1294 = vpow.pop %v1293
        %v1295 = vmul.f32 %v1222, 1.442695
        %v1296 = vpow.pop %v1295
        %v1297 = vmul.f32 %v1223, 1.442695
        %v1298 = vpow.pop %v1297
        %v1299 = vmul.f32 %v1224, 1.442695
        %v1300 = vpow.pop %v1299
        %v1301 = vmul.f32 %v1225, 1.442695
        %v1302 = vpow.pop %v1301
        %v1303 = vmul.f32 %v1226, 1.442695
        %v1304 = vpow.pop %v1303
        %v1305 = vmul.f32 %v1227, 1.442695
        %v1306 = vpow.pop %v1305
        %v1307 = vmul.f32 %v1228, 1.442695
        %v1308 = vpow.pop %v1307
        %v1309 = vmul.f32 %v1229, 1.442695
        %v1310 = vpow.pop %v1309
        %v1311 = vmul.f32 %v1230, 1.442695
        %v1312 = vpow.pop %v1311
        %v1313 = vmul.f32 %v1231, 1.442695
        %v1314 = vpow.pop %v1313
        %v1315 = vmul.f32 %v1232, 1.442695
        %v1316 = vpow.pop %v1315
        %v1317 = vmul.f32 %v1233, 1.442695
        %v1318 = vpow.pop %v1317
        %v1319 = vmul.f32 %v1234, 1.442695
        %v1320 = vpow.pop %v1319
        %v1321 = vmul.f32 %v1235, 1.442695
        %v1322 = vpow.pop %v1321
        %v1323 = vmul.f32 %v1236, 1.442695
        %v1324 = vpow.pop %v1323
        %v1325 = vmul.f32 %v1237, 1.442695
        %v1326 = vpow.pop %v1325
        %v1327 = vmul.f32 %v1238, 1.442695
        %v1328 = vpow.pop %v1327
        %v1329 = vmul.f32 %v1239, 1.442695
        %v1330 = vpow.pop %v1329
        %v1331 = vmul.f32 %v1240, 1.442695
        %v1332 = vpow.pop %v1331
        %v1333 = vmul.f32 %v1241, 1.442695
        %v1334 = vpow.pop %v1333
        %v1335 = vmul.f32 %v1242, 1.442695
        %v1336 = vpow.pop %v1335
        %v1337 = vmul.f32 %v1243, 1.442695
        %v1338 = vpow.pop %v1337
        %v1339 = vmul.f32 %v1244, 1.442695
        %v1340 = vpow.pop %v1339
        %v1341 = vmul.f32 %v1245, 1.442695
        %v1342 = vpow.pop %v1341
        %v1343 = vmul.f32 %v1246, 1.442695
        %v1344 = vpow.pop %v1343
        %v1345 = vmul.f32 %v1247, 1.442695
        %v1346 = vpow.pop %v1345
        %v1347 = vmul.f32 %v1248, 1.442695
        %v1348 = vpow.pop %v1347
        %v1349 = vmul.f32 %v1249, 1.442695
        %v1350 = vpow.pop %v1349
        %v1351 = vmul.f32 %v1250, 1.442695
        %v1352 = vpow.pop %v1351
        %v1353 = vmul.f32 %v1251, 1.442695
        %v1354 = vpow.pop %v1353
        %v1355 = vmul.f32 %v1252, 1.442695
        %v1356 = vpow.pop %v1355
        %v1357 = vmul.f32 %v1253, 1.442695
        %v1358 = vpow.pop %v1357
        %v1359 = vmul.f32 %v1254, 1.442695
        %v1360 = vpow.pop %v1359
        %v1361 = vmul.f32 %v1255, 1.442695
        %v1362 = vpow.pop %v1361
        %v1363 = vmul.f32 %v1256, 1.442695
        %v1364 = vpow.pop %v1363
        %v1365 = vmul.f32 %v1257, 1.442695
        %v1366 = vpow.pop %v1365
        %v1367 = vmul.f32 %v1258, 1.442695
        %v1368 = vpow.pop %v1367
        %v1369 = vmul.f32 %v1259, 1.442695
        %v1370 = vpow.pop %v1369
        %v1371 = vmul.f32 %v1260, 1.442695
        %v1372 = vpow.pop %v1371
        %v1373 = vmul.f32 %v1261, 1.442695
        %v1374 = vpow.pop %v1373
        %v1375 = vmul.f32 %v1262, 1.442695
        %v1376 = vpow.pop %v1375
        %v1377 = vmul.f32 %v1263, 1.442695
        %v1378 = vpow.pop %v1377
        %v1379 = vmul.f32 %v1264, 1.442695
        %v1380 = vpow.pop %v1379
        %v1381 = vmul.f32 %v1265, 1.442695
        %v1382 = vpow.pop %v1381
        %v1383 = vmul.f32 %v1266, 1.442695
        %v1384 = vpow.pop %v1383
        %v1385 = vmul.f32 %v1267, 1.442695
        %v1386 = vpow.pop %v1385
        %v1387 = vmul.f32 %v1268, 1.442695
        %v1388 = vpow.pop %v1387
        %v1389 = vmul.f32 %v1269, 1.442695
        %v1390 = vpow.pop %v1389
        %v1391 = vmul.f32 %v1270, 1.442695
        %v1392 = vpow.pop %v1391
        %v1393 = vmul.f32 %v1271, 1.442695
        %v1394 = vpow.pop %v1393
        %v1395 = vmul.f32 %v1272, 1.442695
        %v1396 = vpow.pop %v1395
        %v1397 = vmul.f32 %v1273, 1.442695
        %v1398 = vpow.pop %v1397
        %v1399 = vmul.f32 %v1274, 1.442695
        %v1400 = vpow.pop %v1399
        %v1401 = vmul.f32 %v1275, 1.442695
        %v1402 = vpow.pop %v1401
        %v1403 = vmul.f32 %v1276, 1.442695
        %v1404 = vpow.pop %v1403
        %v1405 = vadd.f32 %v1278, %v1280
        %1406 = vadd.xlane.f32.xlu0 %v1405
        %v1407 = vpop.xlane.xlu0 %1406
        %v1408 = vadd.f32 %v1282, %v1284
        %1409 = vadd.xlane.f32.xlu0 %v1408
        %v1410 = vpop.xlane.xlu0 %1409
        %v1411 = vadd.f32 %v1286, %v1288
        %1412 = vadd.xlane.f32.xlu0 %v1411
        %v1413 = vpop.xlane.xlu0 %1412
        %v1414 = vadd.f32 %v1290, %v1292
        %1415 = vadd.xlane.f32.xlu0 %v1414
        %v1416 = vpop.xlane.xlu0 %1415
        %v1417 = vadd.f32 %v1294, %v1296
        %1418 = vadd.xlane.f32.xlu0 %v1417
        %v1419 = vpop.xlane.xlu0 %1418
        %v1420 = vadd.f32 %v1298, %v1300
        %1421 = vadd.xlane.f32.xlu0 %v1420
        %v1422 = vpop.xlane.xlu0 %1421
        %v1423 = vadd.f32 %v1302, %v1304
        %1424 = vadd.xlane.f32.xlu0 %v1423
        %v1425 = vpop.xlane.xlu0 %1424
        %v1426 = vadd.f32 %v1306, %v1308
        %1427 = vadd.xlane.f32.xlu0 %v1426
        %v1428 = vpop.xlane.xlu0 %1427
        %v1429 = vadd.f32 %v1310, %v1312
        %1430 = vadd.xlane.f32.xlu0 %v1429
        %v1431 = vpop.xlane.xlu0 %1430
        %v1432 = vadd.f32 %v1314, %v1316
        %1433 = vadd.xlane.f32.xlu0 %v1432
        %v1434 = vpop.xlane.xlu0 %1433
        %v1435 = vadd.f32 %v1318, %v1320
        %1436 = vadd.xlane.f32.xlu0 %v1435
        %v1437 = vpop.xlane.xlu0 %1436
        %v1438 = vadd.f32 %v1322, %v1324
        %1439 = vadd.xlane.f32.xlu0 %v1438
        %v1440 = vpop.xlane.xlu0 %1439
        %v1441 = vadd.f32 %v1326, %v1328
        %1442 = vadd.xlane.f32.xlu0 %v1441
        %v1443 = vpop.xlane.xlu0 %1442
        %v1444 = vadd.f32 %v1330, %v1332
        %1445 = vadd.xlane.f32.xlu0 %v1444
        %v1446 = vpop.xlane.xlu0 %1445
        %v1447 = vadd.f32 %v1334, %v1336
        %1448 = vadd.xlane.f32.xlu0 %v1447
        %v1449 = vpop.xlane.xlu0 %1448
        %v1450 = vadd.f32 %v1338, %v1340
        %1451 = vadd.xlane.f32.xlu0 %v1450
        %v1452 = vpop.xlane.xlu0 %1451
        %v1453 = vadd.f32 %v1342, %v1344
        %1454 = vadd.xlane.f32.xlu0 %v1453
        %v1455 = vpop.xlane.xlu0 %1454
        %v1456 = vadd.f32 %v1346, %v1348
        %1457 = vadd.xlane.f32.xlu0 %v1456
        %v1458 = vpop.xlane.xlu0 %1457
        %v1459 = vadd.f32 %v1350, %v1352
        %1460 = vadd.xlane.f32.xlu0 %v1459
        %v1461 = vpop.xlane.xlu0 %1460
        %v1462 = vadd.f32 %v1354, %v1356
        %1463 = vadd.xlane.f32.xlu0 %v1462
        %v1464 = vpop.xlane.xlu0 %1463
        %v1465 = vadd.f32 %v1358, %v1360
        %1466 = vadd.xlane.f32.xlu0 %v1465
        %v1467 = vpop.xlane.xlu0 %1466
        %v1468 = vadd.f32 %v1362, %v1364
        %1469 = vadd.xlane.f32.xlu0 %v1468
        %v1470 = vpop.xlane.xlu0 %1469
        %v1471 = vadd.f32 %v1366, %v1368
        %1472 = vadd.xlane.f32.xlu0 %v1471
        %v1473 = vpop.xlane.xlu0 %1472
        %v1474 = vadd.f32 %v1370, %v1372
        %1475 = vadd.xlane.f32.xlu0 %v1474
        %v1476 = vpop.xlane.xlu0 %1475
        %v1477 = vadd.f32 %v1374, %v1376
        %1478 = vadd.xlane.f32.xlu0 %v1477
        %v1479 = vpop.xlane.xlu0 %1478
        %v1480 = vadd.f32 %v1378, %v1380
        %1481 = vadd.xlane.f32.xlu0 %v1480
        %v1482 = vpop.xlane.xlu0 %1481
        %v1483 = vadd.f32 %v1382, %v1384
        %1484 = vadd.xlane.f32.xlu0 %v1483
        %v1485 = vpop.xlane.xlu0 %1484
        %v1486 = vadd.f32 %v1386, %v1388
        %1487 = vadd.xlane.f32.xlu0 %v1486
        %v1488 = vpop.xlane.xlu0 %1487
        %v1489 = vadd.f32 %v1390, %v1392
        %1490 = vadd.xlane.f32.xlu0 %v1489
        %v1491 = vpop.xlane.xlu0 %1490
        %v1492 = vadd.f32 %v1394, %v1396
        %1493 = vadd.xlane.f32.xlu0 %v1492
        %v1494 = vpop.xlane.xlu0 %1493
        %v1495 = vadd.f32 %v1398, %v1400
        %1496 = vadd.xlane.f32.xlu0 %v1495
        %v1497 = vpop.xlane.xlu0 %1496
        %v1498 = vadd.f32 %v1402, %v1404
        %1499 = vadd.xlane.f32.xlu0 %v1498
        %v1500 = vpop.xlane.xlu0 %1499
        %v1501 = vrcp.pop %v1407
        %v1502 = vrcp.pop %v1410
        %v1503 = vrcp.pop %v1413
        %v1504 = vrcp.pop %v1416
        %v1505 = vrcp.pop %v1419
        %v1506 = vrcp.pop %v1422
        %v1507 = vrcp.pop %v1425
        %v1508 = vrcp.pop %v1428
        %v1509 = vrcp.pop %v1431
        %v1510 = vrcp.pop %v1434
        %v1511 = vrcp.pop %v1437
        %v1512 = vrcp.pop %v1440
        %v1513 = vrcp.pop %v1443
        %v1514 = vrcp.pop %v1446
        %v1515 = vrcp.pop %v1449
        %v1516 = vrcp.pop %v1452
        %v1517 = vrcp.pop %v1455
        %v1518 = vrcp.pop %v1458
        %v1519 = vrcp.pop %v1461
        %v1520 = vrcp.pop %v1464
        %v1521 = vrcp.pop %v1467
        %v1522 = vrcp.pop %v1470
        %v1523 = vrcp.pop %v1473
        %v1524 = vrcp.pop %v1476
        %v1525 = vrcp.pop %v1479
        %v1526 = vrcp.pop %v1482
        %v1527 = vrcp.pop %v1485
        %v1528 = vrcp.pop %v1488
        %v1529 = vrcp.pop %v1491
        %v1530 = vrcp.pop %v1494
        %v1531 = vrcp.pop %v1497
        %v1532 = vrcp.pop %v1500
        %v1533 = vmul.f32 %v1278, %v1501
        %v1534 = vmul.f32 %v1280, %v1501
        %v1535 = vmul.f32 %v1282, %v1502
        %v1536 = vmul.f32 %v1284, %v1502
        %v1537 = vmul.f32 %v1286, %v1503
        %v1538 = vmul.f32 %v1288, %v1503
        %v1539 = vmul.f32 %v1290, %v1504
        %v1540 = vmul.f32 %v1292, %v1504
        %v1541 = vmul.f32 %v1294, %v1505
        %v1542 = vmul.f32 %v1296, %v1505
        %v1543 = vmul.f32 %v1298, %v1506
        %v1544 = vmul.f32 %v1300, %v1506
        %v1545 = vmul.f32 %v1302, %v1507
        %v1546 = vmul.f32 %v1304, %v1507
        %v1547 = vmul.f32 %v1306, %v1508
        %v1548 = vmul.f32 %v1308, %v1508
        %v1549 = vmul.f32 %v1310, %v1509
        %v1550 = vmul.f32 %v1312, %v1509
        %v1551 = vmul.f32 %v1314, %v1510
        %v1552 = vmul.f32 %v1316, %v1510
        %v1553 = vmul.f32 %v1318, %v1511
        %v1554 = vmul.f32 %v1320, %v1511
        %v1555 = vmul.f32 %v1322, %v1512
        %v1556 = vmul.f32 %v1324, %v1512
        %v1557 = vmul.f32 %v1326, %v1513
        %v1558 = vmul.f32 %v1328, %v1513
        %v1559 = vmul.f32 %v1330, %v1514
        %v1560 = vmul.f32 %v1332, %v1514
        %v1561 = vmul.f32 %v1334, %v1515
        %v1562 = vmul.f32 %v1336, %v1515
        %v1563 = vmul.f32 %v1338, %v1516
        %v1564 = vmul.f32 %v1340, %v1516
        %v1565 = vmul.f32 %v1342, %v1517
        %v1566 = vmul.f32 %v1344, %v1517
        %v1567 = vmul.f32 %v1346, %v1518
        %v1568 = vmul.f32 %v1348, %v1518
        %v1569 = vmul.f32 %v1350, %v1519
        %v1570 = vmul.f32 %v1352, %v1519
        %v1571 = vmul.f32 %v1354, %v1520
        %v1572 = vmul.f32 %v1356, %v1520
        %v1573 = vmul.f32 %v1358, %v1521
        %v1574 = vmul.f32 %v1360, %v1521
        %v1575 = vmul.f32 %v1362, %v1522
        %v1576 = vmul.f32 %v1364, %v1522
        %v1577 = vmul.f32 %v1366, %v1523
        %v1578 = vmul.f32 %v1368, %v1523
        %v1579 = vmul.f32 %v1370, %v1524
        %v1580 = vmul.f32 %v1372, %v1524
        %v1581 = vmul.f32 %v1374, %v1525
        %v1582 = vmul.f32 %v1376, %v1525
        %v1583 = vmul.f32 %v1378, %v1526
        %v1584 = vmul.f32 %v1380, %v1526
        %v1585 = vmul.f32 %v1382, %v1527
        %v1586 = vmul.f32 %v1384, %v1527
        %v1587 = vmul.f32 %v1386, %v1528
        %v1588 = vmul.f32 %v1388, %v1528
        %v1589 = vmul.f32 %v1390, %v1529
        %v1590 = vmul.f32 %v1392, %v1529
        %v1591 = vmul.f32 %v1394, %v1530
        %v1592 = vmul.f32 %v1396, %v1530
        %v1593 = vmul.f32 %v1398, %v1531
        %v1594 = vmul.f32 %v1400, %v1531
        %v1595 = vmul.f32 %v1402, %v1532
        %v1596 = vmul.f32 %v1404, %v1532
        %v1597 = vpack.c.bf16 %v1535, %v1533
        %v1598 = vpack.c.bf16 %v1536, %v1534
        %v1599 = vpack.c.bf16 %v1539, %v1537
        %v1600 = vpack.c.bf16 %v1540, %v1538
        %v1601 = vpack.c.bf16 %v1543, %v1541
        %v1602 = vpack.c.bf16 %v1544, %v1542
        %v1603 = vpack.c.bf16 %v1547, %v1545
        %v1604 = vpack.c.bf16 %v1548, %v1546
        %v1605 = vpack.c.bf16 %v1551, %v1549
        %v1606 = vpack.c.bf16 %v1552, %v1550
        %v1607 = vpack.c.bf16 %v1555, %v1553
        %v1608 = vpack.c.bf16 %v1556, %v1554
        %v1609 = vpack.c.bf16 %v1559, %v1557
        %v1610 = vpack.c.bf16 %v1560, %v1558
        %v1611 = vpack.c.bf16 %v1563, %v1561
        %v1612 = vpack.c.bf16 %v1564, %v1562
        %v1613 = vpack.c.bf16 %v1567, %v1565
        %v1614 = vpack.c.bf16 %v1568, %v1566
        %v1615 = vpack.c.bf16 %v1571, %v1569
        %v1616 = vpack.c.bf16 %v1572, %v1570
        %v1617 = vpack.c.bf16 %v1575, %v1573
        %v1618 = vpack.c.bf16 %v1576, %v1574
        %v1619 = vpack.c.bf16 %v1579, %v1577
        %v1620 = vpack.c.bf16 %v1580, %v1578
        %v1621 = vpack.c.bf16 %v1583, %v1581
        %v1622 = vpack.c.bf16 %v1584, %v1582
        %v1623 = vpack.c.bf16 %v1587, %v1585
        %v1624 = vpack.c.bf16 %v1588, %v1586
        %v1625 = vpack.c.bf16 %v1591, %v1589
        %v1626 = vpack.c.bf16 %v1592, %v1590
        %v1627 = vpack.c.bf16 %v1595, %v1593
        %v1628 = vpack.c.bf16 %v1596, %v1594
        %v1629 = vpack.c.bf16 %v737, %v735
        %v1630 = vpack.c.bf16 %v836, %v834
        %v1631 = vpack.c.bf16 %v742, %v740
        %v1632 = vpack.c.bf16 %v841, %v839
        %1633 = vmatpush.bf16.xpose.msra.mxu0 %v1611
        %1634 = vmatpush.bf16.xpose.msra.mxu0 %v1609
        %1635 = vmatpush.bf16.xpose.msra.mxu0 %v1607
        %1636 = vmatpush.bf16.xpose.msra.mxu0 %v1605
        %1637 = vmatpush.bf16.xpose.msra.mxu0 %v1603
        %1638 = vmatpush.bf16.xpose.msra.mxu0 %v1601
        %1639 = vmatpush.bf16.xpose.msra.mxu0 %v1599
        %1640 = vmatpush.bf16.xpose.msra.mxu0 %v1597
        %1641 = vmatmul.bf16.gmra.mxu0 %v1629
        %v1642 = vpop.f32.mrf.mxu0
        %v1643 = vadd.f32 0.0, %v1642
        %v1644 = vpop.f32.mrf.mxu0
        %v1645 = vadd.f32 0.0, %v1644
        %1646 = vmatmul.bf16.gmra.mxu0 %v1631
        %v1647 = vpop.f32.mrf.mxu0
        %v1648 = vadd.f32 0.0, %v1647
        %v1649 = vpop.f32.mrf.mxu0
        %v1650 = vadd.f32 0.0, %v1649
        %1651 = vdwg.mxu0
        %1652 = vmatpush.bf16.xpose.msra.mxu0 %v1612
        %1653 = vmatpush.bf16.xpose.msra.mxu0 %v1610
        %1654 = vmatpush.bf16.xpose.msra.mxu0 %v1608
        %1655 = vmatpush.bf16.xpose.msra.mxu0 %v1606
        %1656 = vmatpush.bf16.xpose.msra.mxu0 %v1604
        %1657 = vmatpush.bf16.xpose.msra.mxu0 %v1602
        %1658 = vmatpush.bf16.xpose.msra.mxu0 %v1600
        %1659 = vmatpush.bf16.xpose.msra.mxu0 %v1598
        %1660 = vmatmul.bf16.gmra.mxu0 %v1630
        %v1661 = vpop.f32.mrf.mxu0
        %v1662 = vadd.f32 %v1643, %v1661
        %v1663 = vpop.f32.mrf.mxu0
        %v1664 = vadd.f32 %v1645, %v1663
        %1665 = vmatmul.bf16.gmra.mxu0 %v1632
        %v1666 = vpop.f32.mrf.mxu0
        %v1667 = vadd.f32 %v1648, %v1666
        %v1668 = vpop.f32.mrf.mxu0
        %v1669 = vadd.f32 %v1650, %v1668
        %1670 = vdwg.mxu0
        %1671 = vmatpush.bf16.xpose.msra.mxu0 %v1627
        %1672 = vmatpush.bf16.xpose.msra.mxu0 %v1625
        %1673 = vmatpush.bf16.xpose.msra.mxu0 %v1623
        %1674 = vmatpush.bf16.xpose.msra.mxu0 %v1621
        %1675 = vmatpush.bf16.xpose.msra.mxu0 %v1619
        %1676 = vmatpush.bf16.xpose.msra.mxu0 %v1617
        %1677 = vmatpush.bf16.xpose.msra.mxu0 %v1615
        %1678 = vmatpush.bf16.xpose.msra.mxu0 %v1613
        %1679 = vmatmul.bf16.gmra.mxu0 %v1629
        %v1680 = vpop.f32.mrf.mxu0
        %v1681 = vadd.f32 0.0, %v1680
        %v1682 = vpop.f32.mrf.mxu0
        %v1683 = vadd.f32 0.0, %v1682
        %1684 = vmatmul.bf16.gmra.mxu0 %v1631
        %v1685 = vpop.f32.mrf.mxu0
        %v1686 = vadd.f32 0.0, %v1685
        %v1687 = vpop.f32.mrf.mxu0
        %v1688 = vadd.f32 0.0, %v1687
        %1689 = vdwg.mxu0
        %1690 = vmatpush.bf16.xpose.msra.mxu0 %v1628
        %1691 = vmatpush.bf16.xpose.msra.mxu0 %v1626
        %1692 = vmatpush.bf16.xpose.msra.mxu0 %v1624
        %1693 = vmatpush.bf16.xpose.msra.mxu0 %v1622
        %1694 = vmatpush.bf16.xpose.msra.mxu0 %v1620
        %1695 = vmatpush.bf16.xpose.msra.mxu0 %v1618
        %1696 = vmatpush.bf16.xpose.msra.mxu0 %v1616
        %1697 = vmatpush.bf16.xpose.msra.mxu0 %v1614
        %1698 = vmatmul.bf16.gmra.mxu0 %v1630
        %v1699 = vpop.f32.mrf.mxu0
        %v1700 = vadd.f32 %v1681, %v1699
        %v1701 = vpop.f32.mrf.mxu0
        %v1702 = vadd.f32 %v1683, %v1701
        %1703 = vmatmul.bf16.gmra.mxu0 %v1632
        %v1704 = vpop.f32.mrf.mxu0
        %v1705 = vadd.f32 %v1686, %v1704
        %v1706 = vpop.f32.mrf.mxu0
        %v1707 = vadd.f32 %v1688, %v1706
        %1708 = vdwg.mxu0
        %v1709 = vmax.f32 %v1662, 0.0
        %v1710 = vmax.f32 %v1700, 0.0
        %v1711 = vmax.f32 %v1664, 0.0
        %v1712 = vmax.f32 %v1702, 0.0
        %v1713 = vmax.f32 %v1667, 0.0
        %v1714 = vmax.f32 %v1705, 0.0
        %v1715 = vmax.f32 %v1669, 0.0
        %v1716 = vmax.f32 %v1707, 0.0
        %v1717 = vld [vmem:[%s3] sm:$0xff]
        %v1718 = vld [vmem:[%s3 + $0x8] sm:$0xff]
        %v1719 = vld [vmem:[%s3 + $0x10] sm:$0xff]
        %v1720 = vld [vmem:[%s3 + $0x18] sm:$0xff]
        %1722 = vset.pattern.permute.xlu0 0
        %1723 = vperm.xlu0 %1722, %v1717
        %v1724 = vpop.permute.xlu0 %1723
        %1727 = vset.pattern.permute.xlu0 0
        %1728 = vperm.xlu0 %1727, %v1718
        %v1729 = vpop.permute.xlu0 %1728
        %1732 = vset.pattern.permute.xlu0 0
        %1733 = vperm.xlu0 %1732, %v1719
        %v1734 = vpop.permute.xlu0 %1733
        %1737 = vset.pattern.permute.xlu0 0
        %1738 = vperm.xlu0 %1737, %v1720
        %v1739 = vpop.permute.xlu0 %1738
        %v1741 = vmul.f32 %v1709, %v1724
        %v1742 = vmul.f32 %v1710, %v1724
        %v1743 = vmul.f32 %v1711, %v1729
        %v1744 = vmul.f32 %v1712, %v1729
        %v1745 = vmul.f32 %v1713, %v1734
        %v1746 = vmul.f32 %v1714, %v1734
        %v1747 = vmul.f32 %v1715, %v1739
        %v1748 = vmul.f32 %v1716, %v1739
        %v1749 = vld [vmem:[%s4] sm:$0xff]
        %v1750 = vld [vmem:[%s4 + $0x8] sm:$0xff]
        %v1751 = vld [vmem:[%s4 + $0x10] sm:$0xff]
        %v1752 = vld [vmem:[%s4 + $0x18] sm:$0xff]
        %1754 = vset.pattern.permute.xlu0 0
        %1755 = vperm.xlu0 %1754, %v1749
        %v1756 = vpop.permute.xlu0 %1755
        %1759 = vset.pattern.permute.xlu0 0
        %1760 = vperm.xlu0 %1759, %v1750
        %v1761 = vpop.permute.xlu0 %1760
        %1764 = vset.pattern.permute.xlu0 0
        %1765 = vperm.xlu0 %1764, %v1751
        %v1766 = vpop.permute.xlu0 %1765
        %1769 = vset.pattern.permute.xlu0 0
        %1770 = vperm.xlu0 %1769, %v1752
        %v1771 = vpop.permute.xlu0 %1770
        %v1773 = vadd.f32 %v1741, %v1756
        %v1774 = vadd.f32 %v1742, %v1756
        %v1775 = vadd.f32 %v1743, %v1761
        %v1776 = vadd.f32 %v1744, %v1761
        %v1777 = vadd.f32 %v1745, %v1766
        %v1778 = vadd.f32 %v1746, %v1766
        %v1779 = vadd.f32 %v1747, %v1771
        %v1780 = vadd.f32 %v1748, %v1771
        %1781 = vst [vmem:[%s217] sm:$0xff] %v1773
        %1782 = vst [vmem:[%s217 + $0x8] sm:$0xff] %v1774
        %1783 = vst [vmem:[%s217 + $0x10] sm:$0xff] %v1775
        %1784 = vst [vmem:[%s217 + $0x18] sm:$0xff] %v1776
        %1785 = vst [vmem:[%s217 + $0x20] sm:$0xff] %v1777
        %1786 = vst [vmem:[%s217 + $0x28] sm:$0xff] %v1778
        %1787 = vst [vmem:[%s217 + $0x30] sm:$0xff] %v1779
        %1788 = vst [vmem:[%s217 + $0x38] sm:$0xff] %v1780
        %s1789 = sand.u32 %s137, 1
        %s1790 = scalar_lea.sflag [#allocation3], %s1789
        %s1791 = sand.u32 %s137, 1
        %s1792 = smul.addr %s1791, 64
        %s1793 = scalar_lea.vmem [#allocation2], %s1792
        // Predicated region
        $region41: #{tpu_custom_call.1} parent=39 // pred_check
          %p1794 = pneg %p147
        $region42: #{tpu_custom_call.1} parent=39 // pred_check_branch
          %1796 = sbr.rel (%p1794) target = $region44
        $region43: #{tpu_custom_call.1} parent=39 // pred_region
          %1798 = vsyncadd %s1790, 0
          %s1799 = smul.addr %s19, 8
          %s1800 = smul.addr %s1799, 8
          %s1801 = scalar_lea.hbm %s5, %s1800
          %s1802 = sshll.u32 %s1793, 4
          %s1803 = int_to_ptr.vmem [resolvable:$true] %s1802
          %s1804 = sshll.u32 %s1801, 4
          %s1805 = int_to_ptr.hbm [resolvable:$true] %s1804
          %1810 = dma.vmem_to_hbm [thread:$0]  %s1803, 1024, %s1805, %s1790, 256, 256, 16
        $region44: #{tpu_custom_call.1} parent=39 // pred_fallthru
          _
      $region40: #{tpu_custom_call.1} parent=5 // pred_fallthru
        _
      %p1811 = scmp.le.s32.totalorder 2, %s14
      // Predicated region
      $region45: #{tpu_custom_call.1} parent=5 // pred_check
        %p1812 = pneg %p1811
      $region46: #{tpu_custom_call.1} parent=5 // pred_check_branch
        %1814 = sbr.rel (%p1812) target = $region48
      $region47: #{tpu_custom_call.1} parent=5 // pred_region
        %s1815 = ssub.s32 %s14, 2
        // Predicated region
        $region49: #{tpu_custom_call.1} parent=47 // pred_check
          %p1816 = pneg %p153
        $region50: #{tpu_custom_call.1} parent=47 // pred_check_branch
          %1818 = sbr.rel (%p1816) target = $region52
        $region51: #{tpu_custom_call.1} parent=47 // pred_region
          %s1819 = sand.u32 %s138, 1
          %s1820 = scalar_lea.sflag [#allocation3], %s1819
          %s1821 = sand.u32 %s138, 1
          %s1822 = smul.addr %s1821, 64
          %s1823 = scalar_lea.vmem [#allocation2], %s1822
          %1825 = dma.done %s1820, 1024
        $region52: #{tpu_custom_call.1} parent=47 // pred_fallthru
          _
      $region48: #{tpu_custom_call.1} parent=5 // pred_fallthru
        _
    $region6: #{tpu_custom_call.1} parent=1 // loop_footer
      %s18 = sadd.s32 1, %s14
    $region7: #{tpu_custom_call.1} parent=1 // loop_footer_branch
      %13 = sbr.rel target = $region3
    $region8: #{tpu_custom_call.1} parent=1 // loop_exit
      _
    %1826 = vsyncpa [#allocation3], 1
    %s1827 = scalar_lea.sflag [#allocation3], 1
    %1828 = vsyncpa %s1827, 1

</llo_original>
